<compile_context>
chip_gen: v6e
topology: v6e:2x2x1
jax: 0.10.0
libtpu: 0.0.40
codegen_flags: <defaults>
</compile_context>

<pallas_src>
import jax
import jax.numpy as jnp
from jax.experimental import pallas as pl
from jax.experimental.pallas import tpu as pltpu

FEATURES = 384                      # original module: 10000
HIDDEN1 = FEATURES * 2 // 3         # 256   (orig: 6666)
HIDDEN2 = FEATURES * 2 // 3 // 2    # 128   (orig: 3333)
NUM_CLASSES = 10
PADDED_CLASSES = 128                # lane-dense final layer / output slab
BATCH_TILE = 128                    # MXU-friendly batch tile
NEG_PAD = -1e30                     # bias padding -> padded logits exp() -> 0


def mlp_softmax_kernel(x_ref, w1_ref, b1_ref, w2_ref, b2_ref, w3_ref, b3_ref, o_ref):
    """Fused 3-layer MLP + softmax for one batch tile (bf16 matmuls, f32 math)."""
    x = x_ref[...].astype(jnp.bfloat16)   # no-op when x is already bf16

    # Layer 1: Linear(F -> H1) + ReLU   (bf16 MXU, f32 accumulate)
    h1 = jnp.dot(x, w1_ref[...], preferred_element_type=jnp.float32) + b1_ref[...]
    h1 = jnp.maximum(h1, 0.0)

    # Layer 2: Linear(H1 -> H2) + ReLU
    h2 = jnp.dot(h1.astype(jnp.bfloat16), w2_ref[...],
                 preferred_element_type=jnp.float32) + b2_ref[...]
    h2 = jnp.maximum(h2, 0.0)

    # Layer 3: Linear(H2 -> 128 padded).  Padded columns have zero weights and
    # bias = -1e30, so they contribute exp(.) == 0 below.
    logits = jnp.dot(h2.astype(jnp.bfloat16), w3_ref[...],
                     preferred_element_type=jnp.float32) + b3_ref[...]

    # Numerically stable softmax over the (padded) class axis.  Reductions ride
    # XLU/EUP slots with slack -- keep the full 128-lane math (no masking).
    m = jnp.max(logits, axis=-1, keepdims=True)
    e = jnp.exp(logits - m)
    inv = pl.reciprocal(jnp.sum(e, axis=-1, keepdims=True), approx=True)
    o_ref[...] = (e * inv).astype(o_ref.dtype)


def neural_network1_forward(x, params):
    """x: [B, FEATURES] (f32 or bf16).  Returns softmax probabilities [B, 10] f32."""
    w1, b1, w2, b2, w3, b3 = params
    B, F = x.shape
    assert F == FEATURES and B % BATCH_TILE == 0

    grid = (B // BATCH_TILE,)
    full = lambda i: (0, 0)

    # Resident operands: constant index_map + single buffer (never re-fetched).
    def resident(shape):
        return pl.BlockSpec(shape, full, pipeline_mode=pl.Buffered(1))

    out_padded = pl.pallas_call(
        mlp_softmax_kernel,
        out_shape=jax.ShapeDtypeStruct((B, PADDED_CLASSES), jnp.bfloat16),
        grid_spec=pltpu.PrefetchScalarGridSpec(
            num_scalar_prefetch=0,
            grid=grid,
            in_specs=[
                pl.BlockSpec((BATCH_TILE, F), lambda i: (i, 0)),      # x tile (pipelined)
                resident((F, HIDDEN1)),                               # W1 (bf16)
                resident((1, HIDDEN1)),                               # b1 (f32)
                resident((HIDDEN1, HIDDEN2)),                         # W2 (bf16)
                resident((1, HIDDEN2)),                               # b2 (f32)
                resident((HIDDEN2, PADDED_CLASSES)),                  # W3 padded (bf16)
                resident((1, PADDED_CLASSES)),                        # b3 padded (f32)
            ],
            out_specs=pl.BlockSpec((BATCH_TILE, PADDED_CLASSES), lambda i: (i, 0)),
        ),
        compiler_params=pltpu.CompilerParams(
            dimension_semantics=("parallel",),   # megacore sharding on v7x
        ),
    )(x, w1, b1, w2, b2, w3, b3)

    # Slice the lane-dense padded slab back to the 10 real classes; the tiny
    # [B, 10] cast back to f32 matches the PyTorch module's output dtype.
    return out_padded[:, :NUM_CLASSES].astype(jnp.float32)


def init_params(key):
    """PyTorch-style uniform(-1/sqrt(fan_in), 1/sqrt(fan_in)) init.

    Weights stored [in, out] (transposed vs. torch's [out, in]) in bf16; biases
    in f32.  The final layer is padded to PADDED_CLASSES columns (zero weights,
    -1e30 biases) for lane-dense stores and exact padded softmax."""
    ks = jax.random.split(key, 6)

    def linear(kw, kb, fan_in, fan_out):
        bound = 1.0 / jnp.sqrt(jnp.float32(fan_in))
        w = jax.random.uniform(kw, (fan_in, fan_out), jnp.float32, -bound, bound)
        b = jax.random.uniform(kb, (1, fan_out), jnp.float32, -bound, bound)
        return w, b

    w1, b1 = linear(ks[0], ks[1], FEATURES, HIDDEN1)
    w2, b2 = linear(ks[2], ks[3], HIDDEN1, HIDDEN2)
    w3, b3 = linear(ks[4], ks[5], HIDDEN2, NUM_CLASSES)

    w3p = jnp.zeros((HIDDEN2, PADDED_CLASSES), jnp.float32).at[:, :NUM_CLASSES].set(w3)
    b3p = jnp.full((1, PADDED_CLASSES), NEG_PAD, jnp.float32).at[:, :NUM_CLASSES].set(b3)

    return (w1.astype(jnp.bfloat16), b1,
            w2.astype(jnp.bfloat16), b2,
            w3p.astype(jnp.bfloat16), b3p)


def reference_forward(x, params):
    """Pure-JAX reference (same bf16 matmul / f32 accumulate recipe, f32 softmax)."""
    w1, b1, w2, b2, w3, b3 = params
    h1 = jnp.maximum(
        jnp.dot(x.astype(jnp.bfloat16), w1, preferred_element_type=jnp.float32) + b1, 0.0)
    h2 = jnp.maximum(
        jnp.dot(h1.astype(jnp.bfloat16), w2, preferred_element_type=jnp.float32) + b2, 0.0)
    logits = jnp.dot(h2.astype(jnp.bfloat16), w3,
                     preferred_element_type=jnp.float32) + b3
    return jax.nn.softmax(logits, axis=1)[:, :NUM_CLASSES]


if __name__ == "__main__":
    key = jax.random.PRNGKey(0)
    k_params, k_x = jax.random.split(key)

    params = init_params(k_params)
    # 8 grid steps -> 4 pipelined steps per TensorCore on v7x (real overlap).
    B = 8 * BATCH_TILE
    # Upstream producer emits bf16 directly (no standalone wrapper cast).
    x = jax.random.normal(k_x, (B, FEATURES), jnp.bfloat16)

    out = jax.block_until_ready(neural_network1_forward(x, params))
    ref = reference_forward(x, params)

    assert out.shape == (B, NUM_CLASSES)
    # bf16 output probs + approx reciprocal -> allow ~1e-2-level drift.
    assert jnp.allclose(jnp.sum(out, axis=1), 1.0, atol=1e-2)
    assert jnp.allclose(out, ref, atol=1e-2)

    print("KERNEL_OK")
</pallas_src>

<mosaic_0001>
module attributes {stable_mosaic.version = 11 : i64} {
  func.func @mlp_softmax_kernel(%arg0: i32, %arg1: memref<128x384xbf16, #tpu.memory_space<vmem>>, %arg2: memref<384x256xbf16, #tpu.memory_space<vmem>>, %arg3: memref<1x256xf32, #tpu.memory_space<vmem>>, %arg4: memref<256x128xbf16, #tpu.memory_space<vmem>>, %arg5: memref<1x128xf32, #tpu.memory_space<vmem>>, %arg6: memref<128x128xbf16, #tpu.memory_space<vmem>>, %arg7: memref<1x128xf32, #tpu.memory_space<vmem>>, %arg8: memref<128x128xbf16, #tpu.memory_space<vmem>>) attributes {dimension_semantics = [#tpu.dimension_semantics<parallel>], iteration_bounds = array<i64: 8>, scalar_prefetch = 0 : i64, scratch_operands = 0 : i64, tpu.core_type = #tpu.core_type<tc>, window_params = [{transform_indices = @transform_0, window_bounds = array<i64: 128, 384>}, {pipeline_mode = #tpu.pipeline_mode<synchronous>, transform_indices = @transform_1, window_bounds = array<i64: 384, 256>}, {pipeline_mode = #tpu.pipeline_mode<synchronous>, transform_indices = @transform_2, window_bounds = array<i64: 1, 256>}, {pipeline_mode = #tpu.pipeline_mode<synchronous>, transform_indices = @transform_3, window_bounds = array<i64: 256, 128>}, {pipeline_mode = #tpu.pipeline_mode<synchronous>, transform_indices = @transform_4, window_bounds = array<i64: 1, 128>}, {pipeline_mode = #tpu.pipeline_mode<synchronous>, transform_indices = @transform_5, window_bounds = array<i64: 128, 128>}, {pipeline_mode = #tpu.pipeline_mode<synchronous>, transform_indices = @transform_6, window_bounds = array<i64: 1, 128>}, {transform_indices = @transform_7, window_bounds = array<i64: 128, 128>}]} {
    %c0 = arith.constant 0 : index
    %c0_0 = arith.constant 0 : index
    %0 = vector.load %arg1[%c0, %c0_0] : memref<128x384xbf16, #tpu.memory_space<vmem>>, vector<128x384xbf16>
    %c0_1 = arith.constant 0 : index
    %c0_2 = arith.constant 0 : index
    %1 = vector.load %arg2[%c0_1, %c0_2] : memref<384x256xbf16, #tpu.memory_space<vmem>>, vector<384x256xbf16>
    %cst = arith.constant dense<0.000000e+00> : vector<128x256xf32>
    %2 = tpu.matmul %0, %1, %cst {dimension_numbers = #tpu.dot_dimension_numbers<[1], [0], [0], [1], [0, 0, 1, 1], [], []>} : vector<128x384xbf16>, vector<384x256xbf16>, vector<128x256xf32> -> vector<128x256xf32>
    %c0_3 = arith.constant 0 : index
    %c0_4 = arith.constant 0 : index
    %3 = vector.load %arg3[%c0_3, %c0_4] : memref<1x256xf32, #tpu.memory_space<vmem>>, vector<1x256xf32>
    %4 = vector.broadcast %3 : vector<1x256xf32> to vector<128x256xf32>
    %5 = arith.addf %2, %4 : vector<128x256xf32>
    %cst_5 = arith.constant 0.000000e+00 : f32
    %6 = vector.broadcast %cst_5 : f32 to vector<128x256xf32>
    %7 = arith.maximumf %5, %6 : vector<128x256xf32>
    %8 = arith.truncf %7 : vector<128x256xf32> to vector<128x256xbf16>
    %c0_6 = arith.constant 0 : index
    %c0_7 = arith.constant 0 : index
    %9 = vector.load %arg4[%c0_6, %c0_7] : memref<256x128xbf16, #tpu.memory_space<vmem>>, vector<256x128xbf16>
    %cst_8 = arith.constant dense<0.000000e+00> : vector<128x128xf32>
    %10 = tpu.matmul %8, %9, %cst_8 {dimension_numbers = #tpu.dot_dimension_numbers<[1], [0], [0], [1], [0, 0, 1, 1], [], []>} : vector<128x256xbf16>, vector<256x128xbf16>, vector<128x128xf32> -> vector<128x128xf32>
    %c0_9 = arith.constant 0 : index
    %c0_10 = arith.constant 0 : index
    %11 = vector.load %arg5[%c0_9, %c0_10] : memref<1x128xf32, #tpu.memory_space<vmem>>, vector<1x128xf32>
    %12 = vector.broadcast %11 : vector<1x128xf32> to vector<128x128xf32>
    %13 = arith.addf %10, %12 : vector<128x128xf32>
    %cst_11 = arith.constant 0.000000e+00 : f32
    %14 = vector.broadcast %cst_11 : f32 to vector<128x128xf32>
    %15 = arith.maximumf %13, %14 : vector<128x128xf32>
    %16 = arith.truncf %15 : vector<128x128xf32> to vector<128x128xbf16>
    %c0_12 = arith.constant 0 : index
    %c0_13 = arith.constant 0 : index
    %17 = vector.load %arg6[%c0_12, %c0_13] : memref<128x128xbf16, #tpu.memory_space<vmem>>, vector<128x128xbf16>
    %cst_14 = arith.constant dense<0.000000e+00> : vector<128x128xf32>
    %18 = tpu.matmul %16, %17, %cst_14 {dimension_numbers = #tpu.dot_dimension_numbers<[1], [0], [0], [1], [0, 0, 1, 1], [], []>} : vector<128x128xbf16>, vector<128x128xbf16>, vector<128x128xf32> -> vector<128x128xf32>
    %c0_15 = arith.constant 0 : index
    %c0_16 = arith.constant 0 : index
    %19 = vector.load %arg7[%c0_15, %c0_16] : memref<1x128xf32, #tpu.memory_space<vmem>>, vector<1x128xf32>
    %20 = vector.broadcast %19 : vector<1x128xf32> to vector<128x128xf32>
    %21 = arith.addf %18, %20 : vector<128x128xf32>
    %cst_17 = arith.constant dense<0xFF800000> : vector<128xf32>
    %22 = vector.multi_reduction <maximumf>, %21, %cst_17 [1] : vector<128x128xf32> to vector<128xf32>
    %23 = vector.shape_cast %22 : vector<128xf32> to vector<128x1xf32>
    %24 = vector.broadcast %23 : vector<128x1xf32> to vector<128x128xf32>
    %25 = arith.subf %21, %24 : vector<128x128xf32>
    %26 = math.exp %25 : vector<128x128xf32>
    %cst_18 = arith.constant dense<0.000000e+00> : vector<128xf32>
    %27 = vector.multi_reduction <add>, %26, %cst_18 [1] : vector<128x128xf32> to vector<128xf32>
    %28 = vector.shape_cast %27 : vector<128xf32> to vector<128x1xf32>
    %29 = tpu.reciprocal %28 {approx = true} : vector<128x1xf32> -> vector<128x1xf32>
    %30 = vector.broadcast %29 : vector<128x1xf32> to vector<128x128xf32>
    %31 = arith.mulf %26, %30 : vector<128x128xf32>
    %32 = arith.truncf %31 : vector<128x128xf32> to vector<128x128xbf16>
    %c0_19 = arith.constant 0 : index
    %c0_20 = arith.constant 0 : index
    %33 = vector.load %arg8[%c0_19, %c0_20] : memref<128x128xbf16, #tpu.memory_space<vmem>>, vector<128x128xbf16>
    tpu.vector_store %arg8[%c0_19, %c0_20], %32 {strides = array<i32>} : memref<128x128xbf16, #tpu.memory_space<vmem>>, vector<128x128xbf16>,
    return
  }
  func.func @transform_0(%arg0: i32) -> (i32, i32) {
    %c0_i32 = arith.constant 0 : i32
    %c0_i32_0 = arith.constant 0 : i32
    return %arg0, %c0_i32 : i32, i32
  }
  func.func @transform_1(%arg0: i32) -> (i32, i32) {
    %c0_i32 = arith.constant 0 : i32
    %c0_i32_0 = arith.constant 0 : i32
    %c0_i32_1 = arith.constant 0 : i32
    return %c0_i32, %c0_i32_0 : i32, i32
  }
  func.func @transform_2(%arg0: i32) -> (i32, i32) {
    %c0_i32 = arith.constant 0 : i32
    %c0_i32_0 = arith.constant 0 : i32
    %c0_i32_1 = arith.constant 0 : i32
    return %c0_i32, %c0_i32_0 : i32, i32
  }
  func.func @transform_3(%arg0: i32) -> (i32, i32) {
    %c0_i32 = arith.constant 0 : i32
    %c0_i32_0 = arith.constant 0 : i32
    %c0_i32_1 = arith.constant 0 : i32
    return %c0_i32, %c0_i32_0 : i32, i32
  }
  func.func @transform_4(%arg0: i32) -> (i32, i32) {
    %c0_i32 = arith.constant 0 : i32
    %c0_i32_0 = arith.constant 0 : i32
    %c0_i32_1 = arith.constant 0 : i32
    return %c0_i32, %c0_i32_0 : i32, i32
  }
  func.func @transform_5(%arg0: i32) -> (i32, i32) {
    %c0_i32 = arith.constant 0 : i32
    %c0_i32_0 = arith.constant 0 : i32
    %c0_i32_1 = arith.constant 0 : i32
    return %c0_i32, %c0_i32_0 : i32, i32
  }
  func.func @transform_6(%arg0: i32) -> (i32, i32) {
    %c0_i32 = arith.constant 0 : i32
    %c0_i32_0 = arith.constant 0 : i32
    %c0_i32_1 = arith.constant 0 : i32
    return %c0_i32, %c0_i32_0 : i32, i32
  }
  func.func @transform_7(%arg0: i32) -> (i32, i32) {
    %c0_i32 = arith.constant 0 : i32
    %c0_i32_0 = arith.constant 0 : i32
    return %arg0, %c0_i32 : i32, i32
  }
}

</mosaic_0001>

<llo_original>
// kernel: tpu_custom_call.1
$region0: #{tpu_custom_call.1}
  #allocation0 [shape = 'u32[]', space=smem, size = 0x4, offset = 0x4, fixed_abs, tag = 'smem constant byte address 0x4 - core index']
  #allocation1 [shape = 'u32[144,128]{1,0:T(1,128)}', space=vmem, size = 0x12000, scoped, tag = 'internal scratch']
  %s0 = inlined_call_operand.hbm [shape: bf16[1024,384], index: 0, kind: input, shape index: {}]
  %s1 = inlined_call_operand.hbm [shape: bf16[384,256], index: 1, kind: input, shape index: {}]
  %s2 = inlined_call_operand.vmem [shape: f32[1,256], index: 2, kind: input, shape index: {}]
  %s3 = inlined_call_operand.hbm [shape: bf16[256,128], index: 3, kind: input, shape index: {}]
  %s4 = inlined_call_operand.vmem [shape: f32[1,128], index: 4, kind: input, shape index: {}]
  %s5 = inlined_call_operand.hbm [shape: bf16[128,128], index: 5, kind: input, shape index: {}]
  %s6 = inlined_call_operand.vmem [shape: f32[1,128], index: 6, kind: input, shape index: {}]
  %s7 = inlined_call_operand.hbm [shape: bf16[1024,128], index: 7, kind: output, shape index: {}]
  %s8 = sld [smem:[#allocation0]]
  $region77: #{tpu_custom_call.1} parent=0
    _
  %s10 = ssub.s32 1, %s8
  %s11 = scalar_select 0, %s10, %s8
  $region1: #{tpu_custom_call.1} parent=0
    #allocation2 [shape = 'u8[196608]{0}', space=vmem, size = 0x30000, scoped, tag = 'input window, operand 0']
    #allocation3 [shape = 's32[2]{0}', space=sflag, size = 0x8, scoped, tag = 'scoped memory for tpu_custom_call.1']
    #allocation4 [shape = 's32[2]{0}', space=sflag, size = 0x8, scoped, tag = 'scoped memory for tpu_custom_call.1']
    #allocation5 [shape = 'u8[196608]{0}', space=vmem, size = 0x30000, scoped, tag = 'input window, operand 1, single buffered']
    #allocation6 [shape = 's32[1]{0}', space=sflag, size = 0x4, scoped, tag = 'scoped memory for tpu_custom_call.1']
    #allocation7 [shape = 'u8[65536]{0}', space=vmem, size = 0x10000, scoped, tag = 'input window, operand 3, single buffered']
    #allocation8 [shape = 'u8[32768]{0}', space=vmem, size = 0x8000, scoped, tag = 'input window, operand 5, single buffered']
    #allocation9 [shape = 's32[1]{0}', space=sflag, size = 0x4, scoped, tag = 'scoped memory for tpu_custom_call.1']
    #allocation10 [shape = 'u8[65536]{0}', space=vmem, size = 0x10000, scoped, tag = 'output window, operand 0']
    %12 = vsyncpa [#allocation3], 0
    %s13 = scalar_lea.sflag [#allocation3], 1
    %14 = vsyncpa %s13, 0
    %15 = vsyncpa [#allocation6], 0
    %16 = vsyncpa [#allocation9], 0
    %17 = vsyncpa [#allocation4], 0
    %s18 = scalar_lea.sflag [#allocation4], 1
    %19 = vsyncpa %s18, 0
    loop: start=0, step=1, limit=10
    $region2: #{tpu_custom_call.1} parent=1 // loop_pre_header
      _
    $region3: #{tpu_custom_call.1} parent=1 // loop_header
      %s21 = sphi 0, %s25
      %p22 = scmp.ge.s32.totalorder %s21, 10
      %s31 = sphi 0, %s33
      %s34 = sphi 0, %s31
      %s35 = sphi 0, %s34
      %s51 = sphi 0, %s35
      %s55 = sphi 0, %s55
      %s57 = sphi 0, %s55
      %s58 = sphi 0, %s57
      %s72 = sphi 0, %s58
      %s76 = sphi 0, %s76
      %s78 = sphi 0, %s76
      %s79 = sphi 0, %s78
      %s93 = sphi 0, %s79
      %s97 = sphi 0, %s97
      %s99 = sphi 0, %s97
      %s100 = sphi 0, %s99
      %s114 = sphi 0, %s100
      %s118 = sphi 0, %s118
      %s120 = sphi 0, %s118
      %s121 = sphi 0, %s120
      %s135 = sphi 0, %s121
      %s139 = sphi 0, %s139
      %s141 = sphi 0, %s139
      %s142 = sphi 0, %s141
      %s156 = sphi 0, %s142
      %s160 = sphi 0, %s160
      %s162 = sphi 0, %s160
      %s163 = sphi 0, %s162
      %s177 = sphi 0, %s163
      %s183 = sphi 0, %s185
      %s186 = sphi 0, %s183
      %s187 = sphi 0, %s186
      %s203 = sphi 0, %s187
    $region4: #{tpu_custom_call.1} parent=1 // loop_header_branch
      %24 = sbr.rel (%p22) target = $region8
    $region5: #{tpu_custom_call.1} parent=1 // loop_body
      %s26 = ssub.s32 %s21, 1
      %s27 = ssub.s32 %s21, 2
      %s28 = sadd.s32 %s21, 1
      %s29 = ssub.s32 %s21, %s28
      %p30 = scmp.eq.s32.totalorder %s29, 0
      %s32 = sadd.s32 %s31, 1
      %s33 = scalar_select %p30, %s31, %s32
      %p36 = pneg %p30
      %p37 = scmp.eq.s32.totalorder %s21, 7
      %p38 = por %p36, %p37
      %p39 = scmp.ne.s32.totalorder %s31, %s34
      %p40 = scmp.eq.s32.totalorder %s21, 0
      %p41 = por %p39, %p40
      %p42 = scmp.ne.s32.totalorder %s31, %s34
      %p43 = scmp.eq.s32.totalorder %s26, 7
      %p44 = por %p42, %p43
      %p45 = scmp.ne.s32.totalorder %s34, %s35
      %p46 = scmp.eq.s32.totalorder %s26, 0
      %p47 = por %p45, %p46
      %p48 = scmp.ne.s32.totalorder %s34, %s35
      %p49 = scmp.eq.s32.totalorder %s27, 7
      %p50 = por %p48, %p49
      %p52 = scmp.ne.s32.totalorder %s35, %s51
      %p53 = scmp.eq.s32.totalorder %s27, 0
      %p54 = por %p52, %p53
      %s56 = sadd.s32 %s55, 1
      %p59 = scmp.eq.s32.totalorder %s21, 7
      %p60 = scmp.ne.s32.totalorder %s55, %s57
      %p61 = scmp.eq.s32.totalorder %s21, 0
      %p62 = por %p60, %p61
      %p63 = scmp.ne.s32.totalorder %s55, %s57
      %p64 = scmp.eq.s32.totalorder %s26, 7
      %p65 = por %p63, %p64
      %p66 = scmp.ne.s32.totalorder %s57, %s58
      %p67 = scmp.eq.s32.totalorder %s26, 0
      %p68 = por %p66, %p67
      %p69 = scmp.ne.s32.totalorder %s57, %s58
      %p70 = scmp.eq.s32.totalorder %s27, 7
      %p71 = por %p69, %p70
      %p73 = scmp.ne.s32.totalorder %s58, %s72
      %p74 = scmp.eq.s32.totalorder %s27, 0
      %p75 = por %p73, %p74
      %s77 = sadd.s32 %s76, 1
      %p80 = scmp.eq.s32.totalorder %s21, 7
      %p81 = scmp.ne.s32.totalorder %s76, %s78
      %p82 = scmp.eq.s32.totalorder %s21, 0
      %p83 = por %p81, %p82
      %p84 = scmp.ne.s32.totalorder %s76, %s78
      %p85 = scmp.eq.s32.totalorder %s26, 7
      %p86 = por %p84, %p85
      %p87 = scmp.ne.s32.totalorder %s78, %s79
      %p88 = scmp.eq.s32.totalorder %s26, 0
      %p89 = por %p87, %p88
      %p90 = scmp.ne.s32.totalorder %s78, %s79
      %p91 = scmp.eq.s32.totalorder %s27, 7
      %p92 = por %p90, %p91
      %p94 = scmp.ne.s32.totalorder %s79, %s93
      %p95 = scmp.eq.s32.totalorder %s27, 0
      %p96 = por %p94, %p95
      %s98 = sadd.s32 %s97, 1
      %p101 = scmp.eq.s32.totalorder %s21, 7
      %p102 = scmp.ne.s32.totalorder %s97, %s99
      %p103 = scmp.eq.s32.totalorder %s21, 0
      %p104 = por %p102, %p103
      %p105 = scmp.ne.s32.totalorder %s97, %s99
      %p106 = scmp.eq.s32.totalorder %s26, 7
      %p107 = por %p105, %p106
      %p108 = scmp.ne.s32.totalorder %s99, %s100
      %p109 = scmp.eq.s32.totalorder %s26, 0
      %p110 = por %p108, %p109
      %p111 = scmp.ne.s32.totalorder %s99, %s100
      %p112 = scmp.eq.s32.totalorder %s27, 7
      %p113 = por %p111, %p112
      %p115 = scmp.ne.s32.totalorder %s100, %s114
      %p116 = scmp.eq.s32.totalorder %s27, 0
      %p117 = por %p115, %p116
      %s119 = sadd.s32 %s118, 1
      %p122 = scmp.eq.s32.totalorder %s21, 7
      %p123 = scmp.ne.s32.totalorder %s118, %s120
      %p124 = scmp.eq.s32.totalorder %s21, 0
      %p125 = por %p123, %p124
      %p126 = scmp.ne.s32.totalorder %s118, %s120
      %p127 = scmp.eq.s32.totalorder %s26, 7
      %p128 = por %p126, %p127
      %p129 = scmp.ne.s32.totalorder %s120, %s121
      %p130 = scmp.eq.s32.totalorder %s26, 0
      %p131 = por %p129, %p130
      %p132 = scmp.ne.s32.totalorder %s120, %s121
      %p133 = scmp.eq.s32.totalorder %s27, 7
      %p134 = por %p132, %p133
      %p136 = scmp.ne.s32.totalorder %s121, %s135
      %p137 = scmp.eq.s32.totalorder %s27, 0
      %p138 = por %p136, %p137
      %s140 = sadd.s32 %s139, 1
      %p143 = scmp.eq.s32.totalorder %s21, 7
      %p144 = scmp.ne.s32.totalorder %s139, %s141
      %p145 = scmp.eq.s32.totalorder %s21, 0
      %p146 = por %p144, %p145
      %p147 = scmp.ne.s32.totalorder %s139, %s141
      %p148 = scmp.eq.s32.totalorder %s26, 7
      %p149 = por %p147, %p148
      %p150 = scmp.ne.s32.totalorder %s141, %s142
      %p151 = scmp.eq.s32.totalorder %s26, 0
      %p152 = por %p150, %p151
      %p153 = scmp.ne.s32.totalorder %s141, %s142
      %p154 = scmp.eq.s32.totalorder %s27, 7
      %p155 = por %p153, %p154
      %p157 = scmp.ne.s32.totalorder %s142, %s156
      %p158 = scmp.eq.s32.totalorder %s27, 0
      %p159 = por %p157, %p158
      %s161 = sadd.s32 %s160, 1
      %p164 = scmp.eq.s32.totalorder %s21, 7
      %p165 = scmp.ne.s32.totalorder %s160, %s162
      %p166 = scmp.eq.s32.totalorder %s21, 0
      %p167 = por %p165, %p166
      %p168 = scmp.ne.s32.totalorder %s160, %s162
      %p169 = scmp.eq.s32.totalorder %s26, 7
      %p170 = por %p168, %p169
      %p171 = scmp.ne.s32.totalorder %s162, %s163
      %p172 = scmp.eq.s32.totalorder %s26, 0
      %p173 = por %p171, %p172
      %p174 = scmp.ne.s32.totalorder %s162, %s163
      %p175 = scmp.eq.s32.totalorder %s27, 7
      %p176 = por %p174, %p175
      %p178 = scmp.ne.s32.totalorder %s163, %s177
      %p179 = scmp.eq.s32.totalorder %s27, 0
      %p180 = por %p178, %p179
      %s181 = ssub.s32 %s21, %s28
      %p182 = scmp.eq.s32.totalorder %s181, 0
      %s184 = sadd.s32 %s183, 1
      %s185 = scalar_select %p182, %s183, %s184
      %p188 = pneg %p182
      %p189 = scmp.eq.s32.totalorder %s21, 7
      %p190 = por %p188, %p189
      %p191 = scmp.ne.s32.totalorder %s183, %s186
      %p192 = scmp.eq.s32.totalorder %s21, 0
      %p193 = por %p191, %p192
      %p194 = scmp.ne.s32.totalorder %s183, %s186
      %p195 = scmp.eq.s32.totalorder %s26, 7
      %p196 = por %p194, %p195
      %p197 = scmp.ne.s32.totalorder %s186, %s187
      %p198 = scmp.eq.s32.totalorder %s26, 0
      %p199 = por %p197, %p198
      %p200 = scmp.ne.s32.totalorder %s186, %s187
      %p201 = scmp.eq.s32.totalorder %s27, 7
      %p202 = por %p200, %p201
      %p204 = scmp.ne.s32.totalorder %s187, %s203
      %p205 = scmp.eq.s32.totalorder %s27, 0
      %p206 = por %p204, %p205
      %p207 = scmp.le.s32.totalorder 1, %s21
      %p208 = scmp.lt.s32.totalorder %s21, 9
      %p209 = pnand %p207, %p208
      %p210 = pneg %p209
      // Predicated region
      $region9: #{tpu_custom_call.1} parent=5 // pred_check
        _
      $region10: #{tpu_custom_call.1} parent=5 // pred_check_branch
        %212 = sbr.rel (%p209) target = $region12
      $region11: #{tpu_custom_call.1} parent=5 // pred_region
        %s213 = ssub.s32 %s21, 1
        // Predicated region
        $region13: #{tpu_custom_call.1} parent=11 // pred_check
          %p214 = pneg %p68
        $region14: #{tpu_custom_call.1} parent=11 // pred_check_branch
          %216 = sbr.rel (%p214) target = $region16
        $region15: #{tpu_custom_call.1} parent=11 // pred_region
          %s218 = ssub.s32 6144, 6144
          %219 = vsyncadd [#allocation6], %s218
          %s220 = sshll.u32 [#allocation5], 4
          %s221 = int_to_ptr.vmem [resolvable:$true] %s220
          %226 = dma.hbm_to_vmem [thread:$0]  %s1, 6144, %s221, [#allocation6], 128, 128, 8
        $region16: #{tpu_custom_call.1} parent=11 // pred_fallthru
          _
        // Predicated region
        $region17: #{tpu_custom_call.1} parent=11 // pred_check
          %p227 = pneg %p89
        $region18: #{tpu_custom_call.1} parent=11 // pred_check_branch
          %229 = sbr.rel (%p227) target = $region20
        $region19: #{tpu_custom_call.1} parent=11 // pred_region
          _
        $region20: #{tpu_custom_call.1} parent=11 // pred_fallthru
          _
        // Predicated region
        $region21: #{tpu_custom_call.1} parent=11 // pred_check
          %p230 = pneg %p110
        $region22: #{tpu_custom_call.1} parent=11 // pred_check_branch
          %232 = sbr.rel (%p230) target = $region24
        $region23: #{tpu_custom_call.1} parent=11 // pred_region
          %s234 = ssub.s32 2048, 2048
          %235 = vsyncadd [#allocation6], %s234
          %s236 = sshll.u32 [#allocation7], 4
          %s237 = int_to_ptr.vmem [resolvable:$true] %s236
          %242 = dma.hbm_to_vmem [thread:$0]  %s3, 2048, %s237, [#allocation6], 64, 64, 4
        $region24: #{tpu_custom_call.1} parent=11 // pred_fallthru
          _
        // Predicated region
        $region25: #{tpu_custom_call.1} parent=11 // pred_check
          %p243 = pneg %p131
        $region26: #{tpu_custom_call.1} parent=11 // pred_check_branch
          %245 = sbr.rel (%p243) target = $region28
        $region27: #{tpu_custom_call.1} parent=11 // pred_region
          _
        $region28: #{tpu_custom_call.1} parent=11 // pred_fallthru
          _
        // Predicated region
        $region29: #{tpu_custom_call.1} parent=11 // pred_check
          %p246 = pneg %p152
        $region30: #{tpu_custom_call.1} parent=11 // pred_check_branch
          %248 = sbr.rel (%p246) target = $region32
        $region31: #{tpu_custom_call.1} parent=11 // pred_region
          %s250 = ssub.s32 1024, 1024
          %251 = vsyncadd [#allocation9], %s250
          %s252 = sshll.u32 [#allocation8], 4
          %s253 = int_to_ptr.vmem [resolvable:$true] %s252
          %258 = dma.hbm_to_vmem [thread:$0]  %s5, 1024, %s253, [#allocation9], 64, 64, 4
        $region32: #{tpu_custom_call.1} parent=11 // pred_fallthru
          _
        // Predicated region
        $region33: #{tpu_custom_call.1} parent=11 // pred_check
          %p259 = pneg %p173
        $region34: #{tpu_custom_call.1} parent=11 // pred_check_branch
          %261 = sbr.rel (%p259) target = $region36
        $region35: #{tpu_custom_call.1} parent=11 // pred_region
          _
        $region36: #{tpu_custom_call.1} parent=11 // pred_fallthru
          _
      $region12: #{tpu_custom_call.1} parent=5 // pred_fallthru
        _
      %p262 = scmp.lt.s32.totalorder %s21, 8
      // Predicated region
      $region37: #{tpu_custom_call.1} parent=5 // pred_check
        %p263 = pneg %p262
      $region38: #{tpu_custom_call.1} parent=5 // pred_check_branch
        %265 = sbr.rel (%p263) target = $region40
      $region39: #{tpu_custom_call.1} parent=5 // pred_region
        // Predicated region
        $region41: #{tpu_custom_call.1} parent=39 // pred_check
          %p266 = pneg %p41
        $region42: #{tpu_custom_call.1} parent=39 // pred_check_branch
          %268 = sbr.rel (%p266) target = $region44
        $region43: #{tpu_custom_call.1} parent=39 // pred_region
          %s269 = sand.u32 %s31, 1
          %s270 = scalar_lea.sflag [#allocation3], %s269
          %s271 = sand.u32 %s31, 1
          %s272 = smul.addr %s271, 192
          %s273 = scalar_lea.vmem [#allocation2], %s272
          %s274 = smul.u32 16, %s21
          %s276 = ssub.s32 3072, 3072
          %277 = vsyncadd %s270, %s276
          %s278 = smul.addr %s274, 3
          %s279 = smul.addr %s278, 64
          %s280 = scalar_lea.hbm %s0, %s279
          %s281 = sshll.u32 %s273, 4
          %s282 = int_to_ptr.vmem [resolvable:$true] %s281
          %287 = dma.hbm_to_vmem [thread:$0]  %s280, 3072, %s282, %s270, 192, 192, 12
        $region44: #{tpu_custom_call.1} parent=39 // pred_fallthru
          _
      $region40: #{tpu_custom_call.1} parent=5 // pred_fallthru
        _
      %p288 = scmp.le.s32.totalorder 1, %s21
      %p289 = scmp.lt.s32.totalorder %s21, 9
      %p290 = pnand %p288, %p289
      %p291 = pneg %p290
      // Predicated region
      $region45: #{tpu_custom_call.1} parent=5 // pred_check
        _
      $region46: #{tpu_custom_call.1} parent=5 // pred_check_branch
        %293 = sbr.rel (%p290) target = $region48
      $region47: #{tpu_custom_call.1} parent=5 // pred_region
        %s294 = ssub.s32 %s21, 1
        %s295 = sand.u32 %s34, 1
        %s296 = scalar_lea.sflag [#allocation3], %s295
        %s297 = sand.u32 %s34, 1
        %s298 = smul.addr %s297, 192
        %s299 = scalar_lea.vmem [#allocation2], %s298
        // Predicated region
        $region49: #{tpu_custom_call.1} parent=47 // pred_check
          %p300 = pneg %p47
        $region50: #{tpu_custom_call.1} parent=47 // pred_check_branch
          %302 = sbr.rel (%p300) target = $region52
        $region51: #{tpu_custom_call.1} parent=47 // pred_region
          %303 = dma.done %s296, 3072
        $region52: #{tpu_custom_call.1} parent=47 // pred_fallthru
          _
        // Predicated region
        $region53: #{tpu_custom_call.1} parent=47 // pred_check
          %p304 = pneg %p68
        $region54: #{tpu_custom_call.1} parent=47 // pred_check_branch
          %306 = sbr.rel (%p304) target = $region56
        $region55: #{tpu_custom_call.1} parent=47 // pred_region
          %307 = dma.done [#allocation6], 6144
        $region56: #{tpu_custom_call.1} parent=47 // pred_fallthru
          _
        // Predicated region
        $region57: #{tpu_custom_call.1} parent=47 // pred_check
          %p308 = pneg %p110
        $region58: #{tpu_custom_call.1} parent=47 // pred_check_branch
          %310 = sbr.rel (%p308) target = $region60
        $region59: #{tpu_custom_call.1} parent=47 // pred_region
          %311 = dma.done [#allocation6], 2048
        $region60: #{tpu_custom_call.1} parent=47 // pred_fallthru
          _
        // Predicated region
        $region61: #{tpu_custom_call.1} parent=47 // pred_check
          %p312 = pneg %p152
        $region62: #{tpu_custom_call.1} parent=47 // pred_check_branch
          %314 = sbr.rel (%p312) target = $region64
        $region63: #{tpu_custom_call.1} parent=47 // pred_region
          %315 = dma.done [#allocation9], 1024
        $region64: #{tpu_custom_call.1} parent=47 // pred_fallthru
          _
        %s316 = sand.u32 %s34, 1
        %s317 = scalar_lea.sflag [#allocation3], %s316
        %s318 = sand.u32 %s34, 1
        %s319 = smul.addr %s318, 192
        %s320 = scalar_lea.vmem [#allocation2], %s319
        %p321 = pneg %p47
        %p322 = pneg %p44
        %p323 = pneg %p68
        %p324 = pneg %p65
        %p325 = pneg %p89
        %p326 = pneg %p86
        %p327 = pneg %p110
        %p328 = pneg %p107
        %p329 = pneg %p131
        %p330 = pneg %p128
        %p331 = pneg %p152
        %p332 = pneg %p149
        %p333 = pneg %p173
        %p334 = pneg %p170
        %p335 = pneg %p199
        %p336 = pneg %p196
        %s337 = sand.u32 %s186, 1
        %s338 = scalar_lea.sflag [#allocation4], %s337
        %s339 = sand.u32 %s186, 1
        %s340 = smul.addr %s339, 64
        %s341 = scalar_lea.vmem [#allocation10], %s340
        %s342 = smul.u32 16, %s26
        %s343 = smul.u32 16, %s26
        %v345 = vld [vmem:[%s299] sm:$0xff]
        %v346 = vld [vmem:[%s299 + $0x8] sm:$0xf]
        %v347 = vld [vmem:[%s299 + $0xc] sm:$0xff]
        %v348 = vld [vmem:[%s299 + $0x14] sm:$0xf]
        %v349 = vld [vmem:[%s299 + $0x18] sm:$0xff]
        %v350 = vld [vmem:[%s299 + $0x20] sm:$0xf]
        %v351 = vld [vmem:[%s299 + $0x24] sm:$0xff]
        %v352 = vld [vmem:[%s299 + $0x2c] sm:$0xf]
        %v353 = vld [vmem:[%s299 + $0x30] sm:$0xff]
        %v354 = vld [vmem:[%s299 + $0x38] sm:$0xf]
        %v355 = vld [vmem:[%s299 + $0x3c] sm:$0xff]
        %v356 = vld [vmem:[%s299 + $0x44] sm:$0xf]
        %v357 = vld [vmem:[%s299 + $0x48] sm:$0xff]
        %v358 = vld [vmem:[%s299 + $0x50] sm:$0xf]
        %v359 = vld [vmem:[%s299 + $0x54] sm:$0xff]
        %v360 = vld [vmem:[%s299 + $0x5c] sm:$0xf]
        %v361 = vld [vmem:[%s299 + $0x60] sm:$0xff]
        %v362 = vld [vmem:[%s299 + $0x68] sm:$0xf]
        %v363 = vld [vmem:[%s299 + $0x6c] sm:$0xff]
        %v364 = vld [vmem:[%s299 + $0x74] sm:$0xf]
        %v365 = vld [vmem:[%s299 + $0x78] sm:$0xff]
        %v366 = vld [vmem:[%s299 + $0x80] sm:$0xf]
        %v367 = vld [vmem:[%s299 + $0x84] sm:$0xff]
        %v368 = vld [vmem:[%s299 + $0x8c] sm:$0xf]
        %v369 = vld [vmem:[%s299 + $0x90] sm:$0xff]
        %v370 = vld [vmem:[%s299 + $0x98] sm:$0xf]
        %v371 = vld [vmem:[%s299 + $0x9c] sm:$0xff]
        %v372 = vld [vmem:[%s299 + $0xa4] sm:$0xf]
        %v373 = vld [vmem:[%s299 + $0xa8] sm:$0xff]
        %v374 = vld [vmem:[%s299 + $0xb0] sm:$0xf]
        %v375 = vld [vmem:[%s299 + $0xb4] sm:$0xff]
        %v376 = vld [vmem:[%s299 + $0xbc] sm:$0xf]
        %v377 = vld [vmem:[#allocation5] sm:$0xff]
        %v378 = vld [vmem:[#allocation5 + $0x8] sm:$0xff]
        %v379 = vld [vmem:[#allocation5 + $0x10] sm:$0xff]
        %v380 = vld [vmem:[#allocation5 + $0x18] sm:$0xff]
        %v381 = vld [vmem:[#allocation5 + $0x20] sm:$0xff]
        %v382 = vld [vmem:[#allocation5 + $0x28] sm:$0xff]
        %v383 = vld [vmem:[#allocation5 + $0x30] sm:$0xff]
        %v384 = vld [vmem:[#allocation5 + $0x38] sm:$0xff]
        %v385 = vld [vmem:[#allocation5 + $0x40] sm:$0xff]
        %v386 = vld [vmem:[#allocation5 + $0x48] sm:$0xff]
        %v387 = vld [vmem:[#allocation5 + $0x50] sm:$0xff]
        %v388 = vld [vmem:[#allocation5 + $0x58] sm:$0xff]
        %v389 = vld [vmem:[#allocation5 + $0x60] sm:$0xff]
        %v390 = vld [vmem:[#allocation5 + $0x68] sm:$0xff]
        %v391 = vld [vmem:[#allocation5 + $0x70] sm:$0xff]
        %v392 = vld [vmem:[#allocation5 + $0x78] sm:$0xff]
        %v393 = vld [vmem:[#allocation5 + $0x80] sm:$0xff]
        %v394 = vld [vmem:[#allocation5 + $0x88] sm:$0xff]
        %v395 = vld [vmem:[#allocation5 + $0x90] sm:$0xff]
        %v396 = vld [vmem:[#allocation5 + $0x98] sm:$0xff]
        %v397 = vld [vmem:[#allocation5 + $0xa0] sm:$0xff]
        %v398 = vld [vmem:[#allocation5 + $0xa8] sm:$0xff]
        %v399 = vld [vmem:[#allocation5 + $0xb0] sm:$0xff]
        %v400 = vld [vmem:[#allocation5 + $0xb8] sm:$0xff]
        %v401 = vld [vmem:[#allocation5 + $0xc0] sm:$0xff]
        %v402 = vld [vmem:[#allocation5 + $0xc8] sm:$0xff]
        %v403 = vld [vmem:[#allocation5 + $0xd0] sm:$0xff]
        %v404 = vld [vmem:[#allocation5 + $0xd8] sm:$0xff]
        %v405 = vld [vmem:[#allocation5 + $0xe0] sm:$0xff]
        %v406 = vld [vmem:[#allocation5 + $0xe8] sm:$0xff]
        %v407 = vld [vmem:[#allocation5 + $0xf0] sm:$0xff]
        %v408 = vld [vmem:[#allocation5 + $0xf8] sm:$0xff]
        %v409 = vld [vmem:[#allocation5 + $0x100] sm:$0xff]
        %v410 = vld [vmem:[#allocation5 + $0x108] sm:$0xff]
        %v411 = vld [vmem:[#allocation5 + $0x110] sm:$0xff]
        %v412 = vld [vmem:[#allocation5 + $0x118] sm:$0xff]
        %v413 = vld [vmem:[#allocation5 + $0x120] sm:$0xff]
        %v414 = vld [vmem:[#allocation5 + $0x128] sm:$0xff]
        %v415 = vld [vmem:[#allocation5 + $0x130] sm:$0xff]
        %v416 = vld [vmem:[#allocation5 + $0x138] sm:$0xff]
        %v417 = vld [vmem:[#allocation5 + $0x140] sm:$0xff]
        %v418 = vld [vmem:[#allocation5 + $0x148] sm:$0xff]
        %v419 = vld [vmem:[#allocation5 + $0x150] sm:$0xff]
        %v420 = vld [vmem:[#allocation5 + $0x158] sm:$0xff]
        %v421 = vld [vmem:[#allocation5 + $0x160] sm:$0xff]
        %v422 = vld [vmem:[#allocation5 + $0x168] sm:$0xff]
        %v423 = vld [vmem:[#allocation5 + $0x170] sm:$0xff]
        %v424 = vld [vmem:[#allocation5 + $0x178] sm:$0xff]
        %v425 = vld [vmem:[%s2] sm:$0x3]
        %v427 = vlaneseq
        %v428 = vshrl.u32 %v427, 7
        %v429 = vsub.s32 0, %v428
        %v430 = vrot.slane %v425, %v429
        %v431 = vlaneseq
        %v432 = vshrl.u32 %v431, 7
        %v433 = vsub.s32 1, %v432
        %v434 = vrot.slane %v425, %v433
        %v469 = vunpack.c.l.b16 %v345
        %v470 = vunpack.c.h.b16 %v345
        %v471 = vunpack.c.l.b16 %v346
        %v472 = vunpack.c.l.b16 %v347
        %v473 = vunpack.c.h.b16 %v347
        %v474 = vunpack.c.l.b16 %v348
        %v475 = vunpack.c.l.b16 %v349
        %v476 = vunpack.c.h.b16 %v349
        %v477 = vunpack.c.l.b16 %v350
        %v478 = vunpack.c.l.b16 %v351
        %v479 = vunpack.c.h.b16 %v351
        %v480 = vunpack.c.l.b16 %v352
        %v481 = vunpack.c.l.b16 %v353
        %v482 = vunpack.c.h.b16 %v353
        %v483 = vunpack.c.l.b16 %v354
        %v484 = vunpack.c.l.b16 %v355
        %v485 = vunpack.c.h.b16 %v355
        %v486 = vunpack.c.l.b16 %v356
        %v487 = vunpack.c.l.b16 %v357
        %v488 = vunpack.c.h.b16 %v357
        %v489 = vunpack.c.l.b16 %v358
        %v490 = vunpack.c.l.b16 %v359
        %v491 = vunpack.c.h.b16 %v359
        %v492 = vunpack.c.l.b16 %v360
        %v493 = vunpack.c.l.b16 %v361
        %v494 = vunpack.c.h.b16 %v361
        %v495 = vunpack.c.l.b16 %v362
        %v496 = vunpack.c.l.b16 %v363
        %v497 = vunpack.c.h.b16 %v363
        %v498 = vunpack.c.l.b16 %v364
        %v499 = vunpack.c.l.b16 %v365
        %v500 = vunpack.c.h.b16 %v365
        %v501 = vunpack.c.l.b16 %v366
        %v502 = vunpack.c.l.b16 %v367
        %v503 = vunpack.c.h.b16 %v367
        %v504 = vunpack.c.l.b16 %v368
        %v505 = vunpack.c.l.b16 %v369
        %v506 = vunpack.c.h.b16 %v369
        %v507 = vunpack.c.l.b16 %v370
        %v508 = vunpack.c.l.b16 %v371
        %v509 = vunpack.c.h.b16 %v371
        %v510 = vunpack.c.l.b16 %v372
        %v511 = vunpack.c.l.b16 %v373
        %v512 = vunpack.c.h.b16 %v373
        %v513 = vunpack.c.l.b16 %v374
        %v514 = vunpack.c.l.b16 %v375
        %v515 = vunpack.c.h.b16 %v375
        %v516 = vunpack.c.l.b16 %v376
        %v517 = vpack.c.b16 %v472, %v469
        %v518 = vpack.c.b16 %v473, %v470
        %v519 = vpack.c.b16 %v474, %v471
        %v520 = vpack.c.b16 %v478, %v475
        %v521 = vpack.c.b16 %v479, %v476
        %v522 = vpack.c.b16 %v480, %v477
        %v523 = vpack.c.b16 %v484, %v481
        %v524 = vpack.c.b16 %v485, %v482
        %v525 = vpack.c.b16 %v486, %v483
        %v526 = vpack.c.b16 %v490, %v487
        %v527 = vpack.c.b16 %v491, %v488
        %v528 = vpack.c.b16 %v492, %v489
        %v529 = vpack.c.b16 %v496, %v493
        %v530 = vpack.c.b16 %v497, %v494
        %v531 = vpack.c.b16 %v498, %v495
        %v532 = vpack.c.b16 %v502, %v499
        %v533 = vpack.c.b16 %v503, %v500
        %v534 = vpack.c.b16 %v504, %v501
        %v535 = vpack.c.b16 %v508, %v505
        %v536 = vpack.c.b16 %v509, %v506
        %v537 = vpack.c.b16 %v510, %v507
        %v538 = vpack.c.b16 %v514, %v511
        %v539 = vpack.c.b16 %v515, %v512
        %v540 = vpack.c.b16 %v516, %v513
        %v613 = vunpack.c.l.b16 %v377
        %v614 = vunpack.c.h.b16 %v377
        %v615 = vunpack.c.l.b16 %v378
        %v616 = vunpack.c.h.b16 %v378
        %v617 = vunpack.c.l.b16 %v379
        %v618 = vunpack.c.h.b16 %v379
        %v619 = vunpack.c.l.b16 %v380
        %v620 = vunpack.c.h.b16 %v380
        %v621 = vunpack.c.l.b16 %v381
        %v622 = vunpack.c.h.b16 %v381
        %v623 = vunpack.c.l.b16 %v382
        %v624 = vunpack.c.h.b16 %v382
        %v625 = vunpack.c.l.b16 %v383
        %v626 = vunpack.c.h.b16 %v383
        %v627 = vunpack.c.l.b16 %v384
        %v628 = vunpack.c.h.b16 %v384
        %v629 = vunpack.c.l.b16 %v385
        %v630 = vunpack.c.h.b16 %v385
        %v631 = vunpack.c.l.b16 %v386
        %v632 = vunpack.c.h.b16 %v386
        %v633 = vunpack.c.l.b16 %v387
        %v634 = vunpack.c.h.b16 %v387
        %v635 = vunpack.c.l.b16 %v388
        %v636 = vunpack.c.h.b16 %v388
        %v637 = vunpack.c.l.b16 %v389
        %v638 = vunpack.c.h.b16 %v389
        %v639 = vunpack.c.l.b16 %v390
        %v640 = vunpack.c.h.b16 %v390
        %v641 = vunpack.c.l.b16 %v391
        %v642 = vunpack.c.h.b16 %v391
        %v643 = vunpack.c.l.b16 %v392
        %v644 = vunpack.c.h.b16 %v392
        %v645 = vunpack.c.l.b16 %v393
        %v646 = vunpack.c.h.b16 %v393
        %v647 = vunpack.c.l.b16 %v394
        %v648 = vunpack.c.h.b16 %v394
        %v649 = vunpack.c.l.b16 %v395
        %v650 = vunpack.c.h.b16 %v395
        %v651 = vunpack.c.l.b16 %v396
        %v652 = vunpack.c.h.b16 %v396
        %v653 = vunpack.c.l.b16 %v397
        %v654 = vunpack.c.h.b16 %v397
        %v655 = vunpack.c.l.b16 %v398
        %v656 = vunpack.c.h.b16 %v398
        %v657 = vunpack.c.l.b16 %v399
        %v658 = vunpack.c.h.b16 %v399
        %v659 = vunpack.c.l.b16 %v400
        %v660 = vunpack.c.h.b16 %v400
        %v661 = vunpack.c.l.b16 %v401
        %v662 = vunpack.c.h.b16 %v401
        %v663 = vunpack.c.l.b16 %v402
        %v664 = vunpack.c.h.b16 %v402
        %v665 = vunpack.c.l.b16 %v403
        %v666 = vunpack.c.h.b16 %v403
        %v667 = vunpack.c.l.b16 %v404
        %v668 = vunpack.c.h.b16 %v404
        %v669 = vunpack.c.l.b16 %v405
        %v670 = vunpack.c.h.b16 %v405
        %v671 = vunpack.c.l.b16 %v406
        %v672 = vunpack.c.h.b16 %v406
        %v673 = vunpack.c.l.b16 %v407
        %v674 = vunpack.c.h.b16 %v407
        %v675 = vunpack.c.l.b16 %v408
        %v676 = vunpack.c.h.b16 %v408
        %v677 = vunpack.c.l.b16 %v409
        %v678 = vunpack.c.h.b16 %v409
        %v679 = vunpack.c.l.b16 %v410
        %v680 = vunpack.c.h.b16 %v410
        %v681 = vunpack.c.l.b16 %v411
        %v682 = vunpack.c.h.b16 %v411
        %v683 = vunpack.c.l.b16 %v412
        %v684 = vunpack.c.h.b16 %v412
        %v685 = vunpack.c.l.b16 %v413
        %v686 = vunpack.c.h.b16 %v413
        %v687 = vunpack.c.l.b16 %v414
        %v688 = vunpack.c.h.b16 %v414
        %v689 = vunpack.c.l.b16 %v415
        %v690 = vunpack.c.h.b16 %v415
        %v691 = vunpack.c.l.b16 %v416
        %v692 = vunpack.c.h.b16 %v416
        %v693 = vunpack.c.l.b16 %v417
        %v694 = vunpack.c.h.b16 %v417
        %v695 = vunpack.c.l.b16 %v418
        %v696 = vunpack.c.h.b16 %v418
        %v697 = vunpack.c.l.b16 %v419
        %v698 = vunpack.c.h.b16 %v419
        %v699 = vunpack.c.l.b16 %v420
        %v700 = vunpack.c.h.b16 %v420
        %v701 = vunpack.c.l.b16 %v421
        %v702 = vunpack.c.h.b16 %v421
        %v703 = vunpack.c.l.b16 %v422
        %v704 = vunpack.c.h.b16 %v422
        %v705 = vunpack.c.l.b16 %v423
        %v706 = vunpack.c.h.b16 %v423
        %v707 = vunpack.c.l.b16 %v424
        %v708 = vunpack.c.h.b16 %v424
        %v709 = vpack.c.b16 %v615, %v613
        %v710 = vpack.c.b16 %v616, %v614
        %v711 = vpack.c.b16 %v619, %v617
        %v712 = vpack.c.b16 %v620, %v618
        %v713 = vpack.c.b16 %v623, %v621
        %v714 = vpack.c.b16 %v624, %v622
        %v715 = vpack.c.b16 %v627, %v625
        %v716 = vpack.c.b16 %v628, %v626
        %v717 = vpack.c.b16 %v631, %v629
        %v718 = vpack.c.b16 %v632, %v630
        %v719 = vpack.c.b16 %v635, %v633
        %v720 = vpack.c.b16 %v636, %v634
        %v721 = vpack.c.b16 %v639, %v637
        %v722 = vpack.c.b16 %v640, %v638
        %v723 = vpack.c.b16 %v643, %v641
        %v724 = vpack.c.b16 %v644, %v642
        %v725 = vpack.c.b16 %v647, %v645
        %v726 = vpack.c.b16 %v648, %v646
        %v727 = vpack.c.b16 %v651, %v649
        %v728 = vpack.c.b16 %v652, %v650
        %v729 = vpack.c.b16 %v655, %v653
        %v730 = vpack.c.b16 %v656, %v654
        %v731 = vpack.c.b16 %v659, %v657
        %v732 = vpack.c.b16 %v660, %v658
        %v733 = vpack.c.b16 %v663, %v661
        %v734 = vpack.c.b16 %v664, %v662
        %v735 = vpack.c.b16 %v667, %v665
        %v736 = vpack.c.b16 %v668, %v666
        %v737 = vpack.c.b16 %v671, %v669
        %v738 = vpack.c.b16 %v672, %v670
        %v739 = vpack.c.b16 %v675, %v673
        %v740 = vpack.c.b16 %v676, %v674
        %v741 = vpack.c.b16 %v679, %v677
        %v742 = vpack.c.b16 %v680, %v678
        %v743 = vpack.c.b16 %v683, %v681
        %v744 = vpack.c.b16 %v684, %v682
        %v745 = vpack.c.b16 %v687, %v685
        %v746 = vpack.c.b16 %v688, %v686
        %v747 = vpack.c.b16 %v691, %v689
        %v748 = vpack.c.b16 %v692, %v690
        %v749 = vpack.c.b16 %v695, %v693
        %v750 = vpack.c.b16 %v696, %v694
        %v751 = vpack.c.b16 %v699, %v697
        %v752 = vpack.c.b16 %v700, %v698
        %v753 = vpack.c.b16 %v703, %v701
        %v754 = vpack.c.b16 %v704, %v702
        %v755 = vpack.c.b16 %v707, %v705
        %v756 = vpack.c.b16 %v708, %v706
        %805 = vmatprep.subr.bf16.mxu0 %v724
        %806 = vmatpush1.bf16.msra.mxu0 %v723
        %807 = vmatprep.subr.bf16.mxu0 %v722
        %808 = vmatpush1.bf16.msra.mxu0 %v721
        %809 = vmatprep.subr.bf16.mxu0 %v720
        %810 = vmatpush1.bf16.msra.mxu0 %v719
        %811 = vmatprep.subr.bf16.mxu0 %v718
        %812 = vmatpush1.bf16.msra.mxu0 %v717
        %813 = vmatprep.subr.bf16.mxu0 %v716
        %814 = vmatpush1.bf16.msra.mxu0 %v715
        %815 = vmatprep.subr.bf16.mxu0 %v714
        %816 = vmatpush1.bf16.msra.mxu0 %v713
        %817 = vmatprep.subr.bf16.mxu0 %v712
        %818 = vmatpush1.bf16.msra.mxu0 %v711
        %819 = vmatprep.subr.bf16.mxu0 %v710
        %820 = vmatpush1.bf16.msra.mxu0 %v709
        %821 = vmatprep.subr.bf16.mxu0 %v740
        %822 = vmatpush2.bf16.msra.mxu0 %v739
        %823 = vmatprep.subr.bf16.mxu0 %v738
        %824 = vmatpush2.bf16.msra.mxu0 %v737
        %825 = vmatprep.subr.bf16.mxu0 %v736
        %826 = vmatpush2.bf16.msra.mxu0 %v735
        %827 = vmatprep.subr.bf16.mxu0 %v734
        %828 = vmatpush2.bf16.msra.mxu0 %v733
        %829 = vmatprep.subr.bf16.mxu0 %v732
        %830 = vmatpush2.bf16.msra.mxu0 %v731
        %831 = vmatprep.subr.bf16.mxu0 %v730
        %832 = vmatpush2.bf16.msra.mxu0 %v729
        %833 = vmatprep.subr.bf16.mxu0 %v728
        %834 = vmatpush2.bf16.msra.mxu0 %v727
        %835 = vmatprep.subr.bf16.mxu0 %v726
        %836 = vmatpush2.bf16.msra.mxu0 %v725
        %837 = vmatprep.mubr.bf16.mxu0 %v518
        %838 = vmatmul.mubr.bf16.gmra.mxu0 %v517
        %v839 = vpop.f32.mrf.mxu0
        %v840 = vadd.f32 %v430, %v839
        %v841 = vpop.f32.mrf.mxu0
        %v842 = vadd.f32 %v434, %v841
        %v843 = vpop.f32.mrf.mxu0
        %v844 = vadd.f32 %v430, %v843
        %v845 = vpop.f32.mrf.mxu0
        %v846 = vadd.f32 %v434, %v845
        %847 = vmatprep.mubr.bf16.mxu0 %v521
        %848 = vmatmul.mubr.bf16.gmra.mxu0 %v520
        %v849 = vpop.f32.mrf.mxu0
        %v850 = vadd.f32 %v430, %v849
        %v851 = vpop.f32.mrf.mxu0
        %v852 = vadd.f32 %v434, %v851
        %v853 = vpop.f32.mrf.mxu0
        %v854 = vadd.f32 %v430, %v853
        %v855 = vpop.f32.mrf.mxu0
        %v856 = vadd.f32 %v434, %v855
        %857 = vmatprep.mubr.bf16.mxu0 %v524
        %858 = vmatmul.mubr.bf16.gmra.mxu0 %v523
        %v859 = vpop.f32.mrf.mxu0
        %v860 = vadd.f32 %v430, %v859
        %v861 = vpop.f32.mrf.mxu0
        %v862 = vadd.f32 %v434, %v861
        %v863 = vpop.f32.mrf.mxu0
        %v864 = vadd.f32 %v430, %v863
        %v865 = vpop.f32.mrf.mxu0
        %v866 = vadd.f32 %v434, %v865
        %867 = vmatprep.mubr.bf16.mxu0 %v527
        %868 = vmatmul.mubr.bf16.gmra.mxu0 %v526
        %v869 = vpop.f32.mrf.mxu0
        %v870 = vadd.f32 %v430, %v869
        %v871 = vpop.f32.mrf.mxu0
        %v872 = vadd.f32 %v434, %v871
        %v873 = vpop.f32.mrf.mxu0
        %v874 = vadd.f32 %v430, %v873
        %v875 = vpop.f32.mrf.mxu0
        %v876 = vadd.f32 %v434, %v875
        %877 = vmatprep.mubr.bf16.mxu0 %v530
        %878 = vmatmul.mubr.bf16.gmra.mxu0 %v529
        %v879 = vpop.f32.mrf.mxu0
        %v880 = vadd.f32 %v430, %v879
        %v881 = vpop.f32.mrf.mxu0
        %v882 = vadd.f32 %v434, %v881
        %v883 = vpop.f32.mrf.mxu0
        %v884 = vadd.f32 %v430, %v883
        %v885 = vpop.f32.mrf.mxu0
        %v886 = vadd.f32 %v434, %v885
        %887 = vmatprep.mubr.bf16.mxu0 %v533
        %888 = vmatmul.mubr.bf16.gmra.mxu0 %v532
        %v889 = vpop.f32.mrf.mxu0
        %v890 = vadd.f32 %v430, %v889
        %v891 = vpop.f32.mrf.mxu0
        %v892 = vadd.f32 %v434, %v891
        %v893 = vpop.f32.mrf.mxu0
        %v894 = vadd.f32 %v430, %v893
        %v895 = vpop.f32.mrf.mxu0
        %v896 = vadd.f32 %v434, %v895
        %897 = vmatprep.mubr.bf16.mxu0 %v536
        %898 = vmatmul.mubr.bf16.gmra.mxu0 %v535
        %v899 = vpop.f32.mrf.mxu0
        %v900 = vadd.f32 %v430, %v899
        %v901 = vpop.f32.mrf.mxu0
        %v902 = vadd.f32 %v434, %v901
        %v903 = vpop.f32.mrf.mxu0
        %v904 = vadd.f32 %v430, %v903
        %v905 = vpop.f32.mrf.mxu0
        %v906 = vadd.f32 %v434, %v905
        %907 = vmatprep.mubr.bf16.mxu0 %v539
        %908 = vmatmul.mubr.bf16.gmra.mxu0 %v538
        %v909 = vpop.f32.mrf.mxu0
        %v910 = vadd.f32 %v430, %v909
        %v911 = vpop.f32.mrf.mxu0
        %v912 = vadd.f32 %v434, %v911
        %v913 = vpop.f32.mrf.mxu0
        %v914 = vadd.f32 %v430, %v913
        %v915 = vpop.f32.mrf.mxu0
        %v916 = vadd.f32 %v434, %v915
        %917 = vdwg.mxu0
        %918 = vmatprep.subr.bf16.mxu0 %v756
        %919 = vmatpush1.bf16.msra.mxu0 %v755
        %920 = vmatprep.subr.bf16.mxu0 %v754
        %921 = vmatpush1.bf16.msra.mxu0 %v753
        %922 = vmatprep.subr.bf16.mxu0 %v752
        %923 = vmatpush1.bf16.msra.mxu0 %v751
        %924 = vmatprep.subr.bf16.mxu0 %v750
        %925 = vmatpush1.bf16.msra.mxu0 %v749
        %926 = vmatprep.subr.bf16.mxu0 %v748
        %927 = vmatpush1.bf16.msra.mxu0 %v747
        %928 = vmatprep.subr.bf16.mxu0 %v746
        %929 = vmatpush1.bf16.msra.mxu0 %v745
        %930 = vmatprep.subr.bf16.mxu0 %v744
        %931 = vmatpush1.bf16.msra.mxu0 %v743
        %932 = vmatprep.subr.bf16.mxu0 %v742
        %933 = vmatpush1.bf16.msra.mxu0 %v741
        %934 = vmatprep.subr.bf16.mxu0 0
        %935 = vmatpush2.bf16.msra.mxu0 0
        %936 = vmatprep.subr.bf16.mxu0 0
        %937 = vmatpush2.bf16.msra.mxu0 0
        %938 = vmatprep.subr.bf16.mxu0 0
        %939 = vmatpush2.bf16.msra.mxu0 0
        %940 = vmatprep.subr.bf16.mxu0 0
        %941 = vmatpush2.bf16.msra.mxu0 0
        %942 = vmatprep.subr.bf16.mxu0 0
        %943 = vmatpush2.bf16.msra.mxu0 0
        %944 = vmatprep.subr.bf16.mxu0 0
        %945 = vmatpush2.bf16.msra.mxu0 0
        %946 = vmatprep.subr.bf16.mxu0 0
        %947 = vmatpush2.bf16.msra.mxu0 0
        %948 = vmatprep.subr.bf16.mxu0 0
        %949 = vmatpush2.bf16.msra.mxu0 0
        %950 = vmatprep.mubr.bf16.mxu0 0
        %951 = vmatmul.mubr.bf16.gmra.mxu0 %v519
        %v952 = vpop.f32.mrf.mxu0
        %v953 = vadd.f32 %v840, %v952
        %v954 = vpop.f32.mrf.mxu0
        %v955 = vadd.f32 %v842, %v954
        %v956 = vpop.f32.mrf.mxu0
        %v957 = vadd.f32 %v844, %v956
        %v958 = vpop.f32.mrf.mxu0
        %v959 = vadd.f32 %v846, %v958
        %960 = vmatprep.mubr.bf16.mxu0 0
        %961 = vmatmul.mubr.bf16.gmra.mxu0 %v522
        %v962 = vpop.f32.mrf.mxu0
        %v963 = vadd.f32 %v850, %v962
        %v964 = vpop.f32.mrf.mxu0
        %v965 = vadd.f32 %v852, %v964
        %v966 = vpop.f32.mrf.mxu0
        %v967 = vadd.f32 %v854, %v966
        %v968 = vpop.f32.mrf.mxu0
        %v969 = vadd.f32 %v856, %v968
        %970 = vmatprep.mubr.bf16.mxu0 0
        %971 = vmatmul.mubr.bf16.gmra.mxu0 %v525
        %v972 = vpop.f32.mrf.mxu0
        %v973 = vadd.f32 %v860, %v972
        %v974 = vpop.f32.mrf.mxu0
        %v975 = vadd.f32 %v862, %v974
        %v976 = vpop.f32.mrf.mxu0
        %v977 = vadd.f32 %v864, %v976
        %v978 = vpop.f32.mrf.mxu0
        %v979 = vadd.f32 %v866, %v978
        %980 = vmatprep.mubr.bf16.mxu0 0
        %981 = vmatmul.mubr.bf16.gmra.mxu0 %v528
        %v982 = vpop.f32.mrf.mxu0
        %v983 = vadd.f32 %v870, %v982
        %v984 = vpop.f32.mrf.mxu0
        %v985 = vadd.f32 %v872, %v984
        %v986 = vpop.f32.mrf.mxu0
        %v987 = vadd.f32 %v874, %v986
        %v988 = vpop.f32.mrf.mxu0
        %v989 = vadd.f32 %v876, %v988
        %990 = vmatprep.mubr.bf16.mxu0 0
        %991 = vmatmul.mubr.bf16.gmra.mxu0 %v531
        %v992 = vpop.f32.mrf.mxu0
        %v993 = vadd.f32 %v880, %v992
        %v994 = vpop.f32.mrf.mxu0
        %v995 = vadd.f32 %v882, %v994
        %v996 = vpop.f32.mrf.mxu0
        %v997 = vadd.f32 %v884, %v996
        %v998 = vpop.f32.mrf.mxu0
        %v999 = vadd.f32 %v886, %v998
        %1000 = vmatprep.mubr.bf16.mxu0 0
        %1001 = vmatmul.mubr.bf16.gmra.mxu0 %v534
        %v1002 = vpop.f32.mrf.mxu0
        %v1003 = vadd.f32 %v890, %v1002
        %v1004 = vpop.f32.mrf.mxu0
        %v1005 = vadd.f32 %v892, %v1004
        %v1006 = vpop.f32.mrf.mxu0
        %v1007 = vadd.f32 %v894, %v1006
        %v1008 = vpop.f32.mrf.mxu0
        %v1009 = vadd.f32 %v896, %v1008
        %1010 = vmatprep.mubr.bf16.mxu0 0
        %1011 = vmatmul.mubr.bf16.gmra.mxu0 %v537
        %v1012 = vpop.f32.mrf.mxu0
        %v1013 = vadd.f32 %v900, %v1012
        %v1014 = vpop.f32.mrf.mxu0
        %v1015 = vadd.f32 %v902, %v1014
        %v1016 = vpop.f32.mrf.mxu0
        %v1017 = vadd.f32 %v904, %v1016
        %v1018 = vpop.f32.mrf.mxu0
        %v1019 = vadd.f32 %v906, %v1018
        %1020 = vmatprep.mubr.bf16.mxu0 0
        %1021 = vmatmul.mubr.bf16.gmra.mxu0 %v540
        %v1022 = vpop.f32.mrf.mxu0
        %v1023 = vadd.f32 %v910, %v1022
        %v1024 = vpop.f32.mrf.mxu0
        %v1025 = vadd.f32 %v912, %v1024
        %v1026 = vpop.f32.mrf.mxu0
        %v1027 = vadd.f32 %v914, %v1026
        %v1028 = vpop.f32.mrf.mxu0
        %v1029 = vadd.f32 %v916, %v1028
        %1030 = vdwg.mxu0
        %v1031 = vmax.f32 %v953, 0.0
        %v1032 = vmax.f32 %v955, 0.0
        %v1033 = vmax.f32 %v957, 0.0
        %v1034 = vmax.f32 %v959, 0.0
        %v1035 = vmax.f32 %v963, 0.0
        %v1036 = vmax.f32 %v965, 0.0
        %v1037 = vmax.f32 %v967, 0.0
        %v1038 = vmax.f32 %v969, 0.0
        %v1039 = vmax.f32 %v973, 0.0
        %v1040 = vmax.f32 %v975, 0.0
        %v1041 = vmax.f32 %v977, 0.0
        %v1042 = vmax.f32 %v979, 0.0
        %v1043 = vmax.f32 %v983, 0.0
        %v1044 = vmax.f32 %v985, 0.0
        %v1045 = vmax.f32 %v987, 0.0
        %v1046 = vmax.f32 %v989, 0.0
        %v1047 = vmax.f32 %v993, 0.0
        %v1048 = vmax.f32 %v995, 0.0
        %v1049 = vmax.f32 %v997, 0.0
        %v1050 = vmax.f32 %v999, 0.0
        %v1051 = vmax.f32 %v1003, 0.0
        %v1052 = vmax.f32 %v1005, 0.0
        %v1053 = vmax.f32 %v1007, 0.0
        %v1054 = vmax.f32 %v1009, 0.0
        %v1055 = vmax.f32 %v1013, 0.0
        %v1056 = vmax.f32 %v1015, 0.0
        %v1057 = vmax.f32 %v1017, 0.0
        %v1058 = vmax.f32 %v1019, 0.0
        %v1059 = vmax.f32 %v1023, 0.0
        %v1060 = vmax.f32 %v1025, 0.0
        %v1061 = vmax.f32 %v1027, 0.0
        %v1062 = vmax.f32 %v1029, 0.0
        %v1063 = vpack.c.bf16 %v1033, %v1031
        %v1064 = vpack.c.bf16 %v1034, %v1032
        %v1065 = vpack.c.bf16 %v1037, %v1035
        %v1066 = vpack.c.bf16 %v1038, %v1036
        %v1067 = vpack.c.bf16 %v1041, %v1039
        %v1068 = vpack.c.bf16 %v1042, %v1040
        %v1069 = vpack.c.bf16 %v1045, %v1043
        %v1070 = vpack.c.bf16 %v1046, %v1044
        %v1071 = vpack.c.bf16 %v1049, %v1047
        %v1072 = vpack.c.bf16 %v1050, %v1048
        %v1073 = vpack.c.bf16 %v1053, %v1051
        %v1074 = vpack.c.bf16 %v1054, %v1052
        %v1075 = vpack.c.bf16 %v1057, %v1055
        %v1076 = vpack.c.bf16 %v1058, %v1056
        %v1077 = vpack.c.bf16 %v1061, %v1059
        %v1078 = vpack.c.bf16 %v1062, %v1060
        %v1079 = vld [vmem:[#allocation7] sm:$0xf]
        %v1080 = vld [vmem:[#allocation7 + $0x4] sm:$0xf]
        %v1081 = vld [vmem:[#allocation7 + $0x8] sm:$0xf]
        %v1082 = vld [vmem:[#allocation7 + $0xc] sm:$0xf]
        %v1083 = vld [vmem:[#allocation7 + $0x10] sm:$0xf]
        %v1084 = vld [vmem:[#allocation7 + $0x14] sm:$0xf]
        %v1085 = vld [vmem:[#allocation7 + $0x18] sm:$0xf]
        %v1086 = vld [vmem:[#allocation7 + $0x1c] sm:$0xf]
        %v1087 = vld [vmem:[#allocation7 + $0x20] sm:$0xf]
        %v1088 = vld [vmem:[#allocation7 + $0x24] sm:$0xf]
        %v1089 = vld [vmem:[#allocation7 + $0x28] sm:$0xf]
        %v1090 = vld [vmem:[#allocation7 + $0x2c] sm:$0xf]
        %v1091 = vld [vmem:[#allocation7 + $0x30] sm:$0xf]
        %v1092 = vld [vmem:[#allocation7 + $0x34] sm:$0xf]
        %v1093 = vld [vmem:[#allocation7 + $0x38] sm:$0xf]
        %v1094 = vld [vmem:[#allocation7 + $0x3c] sm:$0xf]
        %v1095 = vld [vmem:[#allocation7 + $0x40] sm:$0xf]
        %v1096 = vld [vmem:[#allocation7 + $0x44] sm:$0xf]
        %v1097 = vld [vmem:[#allocation7 + $0x48] sm:$0xf]
        %v1098 = vld [vmem:[#allocation7 + $0x4c] sm:$0xf]
        %v1099 = vld [vmem:[#allocation7 + $0x50] sm:$0xf]
        %v1100 = vld [vmem:[#allocation7 + $0x54] sm:$0xf]
        %v1101 = vld [vmem:[#allocation7 + $0x58] sm:$0xf]
        %v1102 = vld [vmem:[#allocation7 + $0x5c] sm:$0xf]
        %v1103 = vld [vmem:[#allocation7 + $0x60] sm:$0xf]
        %v1104 = vld [vmem:[#allocation7 + $0x64] sm:$0xf]
        %v1105 = vld [vmem:[#allocation7 + $0x68] sm:$0xf]
        %v1106 = vld [vmem:[#allocation7 + $0x6c] sm:$0xf]
        %v1107 = vld [vmem:[#allocation7 + $0x70] sm:$0xf]
        %v1108 = vld [vmem:[#allocation7 + $0x74] sm:$0xf]
        %v1109 = vld [vmem:[#allocation7 + $0x78] sm:$0xf]
        %v1110 = vld [vmem:[#allocation7 + $0x7c] sm:$0xf]
        %v1111 = vld [vmem:[%s4] sm:$0x1]
        %v1113 = vlaneseq
        %v1114 = vshrl.u32 %v1113, 7
        %v1115 = vsub.s32 0, %v1114
        %v1116 = vrot.slane %v1111, %v1115
        %v1150 = vunpack.c.l.b16 %v1079
        %v1151 = vunpack.c.l.b16 %v1080
        %v1152 = vunpack.c.l.b16 %v1081
        %v1153 = vunpack.c.l.b16 %v1082
        %v1154 = vunpack.c.l.b16 %v1083
        %v1155 = vunpack.c.l.b16 %v1084
        %v1156 = vunpack.c.l.b16 %v1085
        %v1157 = vunpack.c.l.b16 %v1086
        %v1158 = vunpack.c.l.b16 %v1087
        %v1159 = vunpack.c.l.b16 %v1088
        %v1160 = vunpack.c.l.b16 %v1089
        %v1161 = vunpack.c.l.b16 %v1090
        %v1162 = vunpack.c.l.b16 %v1091
        %v1163 = vunpack.c.l.b16 %v1092
        %v1164 = vunpack.c.l.b16 %v1093
        %v1165 = vunpack.c.l.b16 %v1094
        %v1166 = vunpack.c.l.b16 %v1095
        %v1167 = vunpack.c.l.b16 %v1096
        %v1168 = vunpack.c.l.b16 %v1097
        %v1169 = vunpack.c.l.b16 %v1098
        %v1170 = vunpack.c.l.b16 %v1099
        %v1171 = vunpack.c.l.b16 %v1100
        %v1172 = vunpack.c.l.b16 %v1101
        %v1173 = vunpack.c.l.b16 %v1102
        %v1174 = vunpack.c.l.b16 %v1103
        %v1175 = vunpack.c.l.b16 %v1104
        %v1176 = vunpack.c.l.b16 %v1105
        %v1177 = vunpack.c.l.b16 %v1106
        %v1178 = vunpack.c.l.b16 %v1107
        %v1179 = vunpack.c.l.b16 %v1108
        %v1180 = vunpack.c.l.b16 %v1109
        %v1181 = vunpack.c.l.b16 %v1110
        %v1182 = vpack.c.b16 %v1151, %v1150
        %v1183 = vpack.c.b16 %v1153, %v1152
        %v1184 = vpack.c.b16 %v1155, %v1154
        %v1185 = vpack.c.b16 %v1157, %v1156
        %v1186 = vpack.c.b16 %v1159, %v1158
        %v1187 = vpack.c.b16 %v1161, %v1160
        %v1188 = vpack.c.b16 %v1163, %v1162
        %v1189 = vpack.c.b16 %v1165, %v1164
        %v1190 = vpack.c.b16 %v1167, %v1166
        %v1191 = vpack.c.b16 %v1169, %v1168
        %v1192 = vpack.c.b16 %v1171, %v1170
        %v1193 = vpack.c.b16 %v1173, %v1172
        %v1194 = vpack.c.b16 %v1175, %v1174
        %v1195 = vpack.c.b16 %v1177, %v1176
        %v1196 = vpack.c.b16 %v1179, %v1178
        %v1197 = vpack.c.b16 %v1181, %v1180
        %1214 = vmatprep.subr.bf16.mxu0 0
        %1215 = vmatpush1.bf16.msra.mxu0 %v1189
        %1216 = vmatprep.subr.bf16.mxu0 0
        %1217 = vmatpush1.bf16.msra.mxu0 %v1188
        %1218 = vmatprep.subr.bf16.mxu0 0
        %1219 = vmatpush1.bf16.msra.mxu0 %v1187
        %1220 = vmatprep.subr.bf16.mxu0 0
        %1221 = vmatpush1.bf16.msra.mxu0 %v1186
        %1222 = vmatprep.subr.bf16.mxu0 0
        %1223 = vmatpush1.bf16.msra.mxu0 %v1185
        %1224 = vmatprep.subr.bf16.mxu0 0
        %1225 = vmatpush1.bf16.msra.mxu0 %v1184
        %1226 = vmatprep.subr.bf16.mxu0 0
        %1227 = vmatpush1.bf16.msra.mxu0 %v1183
        %1228 = vmatprep.subr.bf16.mxu0 0
        %1229 = vmatpush1.bf16.msra.mxu0 %v1182
        %1230 = vmatprep.subr.bf16.mxu0 0
        %1231 = vmatpush2.bf16.msra.mxu0 %v1197
        %1232 = vmatprep.subr.bf16.mxu0 0
        %1233 = vmatpush2.bf16.msra.mxu0 %v1196
        %1234 = vmatprep.subr.bf16.mxu0 0
        %1235 = vmatpush2.bf16.msra.mxu0 %v1195
        %1236 = vmatprep.subr.bf16.mxu0 0
        %1237 = vmatpush2.bf16.msra.mxu0 %v1194
        %1238 = vmatprep.subr.bf16.mxu0 0
        %1239 = vmatpush2.bf16.msra.mxu0 %v1193
        %1240 = vmatprep.subr.bf16.mxu0 0
        %1241 = vmatpush2.bf16.msra.mxu0 %v1192
        %1242 = vmatprep.subr.bf16.mxu0 0
        %1243 = vmatpush2.bf16.msra.mxu0 %v1191
        %1244 = vmatprep.subr.bf16.mxu0 0
        %1245 = vmatpush2.bf16.msra.mxu0 %v1190
        %1246 = vmatprep.mubr.bf16.mxu0 %v1064
        %1247 = vmatmul.mubr.bf16.gmra.mxu0 %v1063
        %v1248 = vpop.f32.mrf.mxu0
        %v1249 = vadd.f32 %v1116, %v1248
        %v1250 = vpop.f32.mrf.mxu0
        %v1251 = vpop.f32.mrf.mxu0
        %v1252 = vadd.f32 %v1116, %v1251
        %v1253 = vpop.f32.mrf.mxu0
        %1254 = vmatprep.mubr.bf16.mxu0 %v1066
        %1255 = vmatmul.mubr.bf16.gmra.mxu0 %v1065
        %v1256 = vpop.f32.mrf.mxu0
        %v1257 = vadd.f32 %v1116, %v1256
        %v1258 = vpop.f32.mrf.mxu0
        %v1259 = vpop.f32.mrf.mxu0
        %v1260 = vadd.f32 %v1116, %v1259
        %v1261 = vpop.f32.mrf.mxu0
        %1262 = vmatprep.mubr.bf16.mxu0 %v1068
        %1263 = vmatmul.mubr.bf16.gmra.mxu0 %v1067
        %v1264 = vpop.f32.mrf.mxu0
        %v1265 = vadd.f32 %v1116, %v1264
        %v1266 = vpop.f32.mrf.mxu0
        %v1267 = vpop.f32.mrf.mxu0
        %v1268 = vadd.f32 %v1116, %v1267
        %v1269 = vpop.f32.mrf.mxu0
        %1270 = vmatprep.mubr.bf16.mxu0 %v1070
        %1271 = vmatmul.mubr.bf16.gmra.mxu0 %v1069
        %v1272 = vpop.f32.mrf.mxu0
        %v1273 = vadd.f32 %v1116, %v1272
        %v1274 = vpop.f32.mrf.mxu0
        %v1275 = vpop.f32.mrf.mxu0
        %v1276 = vadd.f32 %v1116, %v1275
        %v1277 = vpop.f32.mrf.mxu0
        %1278 = vmatprep.mubr.bf16.mxu0 %v1072
        %1279 = vmatmul.mubr.bf16.gmra.mxu0 %v1071
        %v1280 = vpop.f32.mrf.mxu0
        %v1281 = vadd.f32 %v1116, %v1280
        %v1282 = vpop.f32.mrf.mxu0
        %v1283 = vpop.f32.mrf.mxu0
        %v1284 = vadd.f32 %v1116, %v1283
        %v1285 = vpop.f32.mrf.mxu0
        %1286 = vmatprep.mubr.bf16.mxu0 %v1074
        %1287 = vmatmul.mubr.bf16.gmra.mxu0 %v1073
        %v1288 = vpop.f32.mrf.mxu0
        %v1289 = vadd.f32 %v1116, %v1288
        %v1290 = vpop.f32.mrf.mxu0
        %v1291 = vpop.f32.mrf.mxu0
        %v1292 = vadd.f32 %v1116, %v1291
        %v1293 = vpop.f32.mrf.mxu0
        %1294 = vmatprep.mubr.bf16.mxu0 %v1076
        %1295 = vmatmul.mubr.bf16.gmra.mxu0 %v1075
        %v1296 = vpop.f32.mrf.mxu0
        %v1297 = vadd.f32 %v1116, %v1296
        %v1298 = vpop.f32.mrf.mxu0
        %v1299 = vpop.f32.mrf.mxu0
        %v1300 = vadd.f32 %v1116, %v1299
        %v1301 = vpop.f32.mrf.mxu0
        %1302 = vmatprep.mubr.bf16.mxu0 %v1078
        %1303 = vmatmul.mubr.bf16.gmra.mxu0 %v1077
        %v1304 = vpop.f32.mrf.mxu0
        %v1305 = vadd.f32 %v1116, %v1304
        %v1306 = vpop.f32.mrf.mxu0
        %v1307 = vpop.f32.mrf.mxu0
        %v1308 = vadd.f32 %v1116, %v1307
        %v1309 = vpop.f32.mrf.mxu0
        %1310 = vdwg.mxu0
        %v1311 = vmax.f32 %v1249, 0.0
        %v1312 = vmax.f32 %v1252, 0.0
        %v1313 = vmax.f32 %v1257, 0.0
        %v1314 = vmax.f32 %v1260, 0.0
        %v1315 = vmax.f32 %v1265, 0.0
        %v1316 = vmax.f32 %v1268, 0.0
        %v1317 = vmax.f32 %v1273, 0.0
        %v1318 = vmax.f32 %v1276, 0.0
        %v1319 = vmax.f32 %v1281, 0.0
        %v1320 = vmax.f32 %v1284, 0.0
        %v1321 = vmax.f32 %v1289, 0.0
        %v1322 = vmax.f32 %v1292, 0.0
        %v1323 = vmax.f32 %v1297, 0.0
        %v1324 = vmax.f32 %v1300, 0.0
        %v1325 = vmax.f32 %v1305, 0.0
        %v1326 = vmax.f32 %v1308, 0.0
        %v1327 = vpack.c.bf16 %v1312, %v1311
        %v1328 = vpack.c.bf16 %v1314, %v1313
        %v1329 = vpack.c.bf16 %v1316, %v1315
        %v1330 = vpack.c.bf16 %v1318, %v1317
        %v1331 = vpack.c.bf16 %v1320, %v1319
        %v1332 = vpack.c.bf16 %v1322, %v1321
        %v1333 = vpack.c.bf16 %v1324, %v1323
        %v1334 = vpack.c.bf16 %v1326, %v1325
        %v1335 = vld [vmem:[#allocation8] sm:$0xf]
        %v1336 = vld [vmem:[#allocation8 + $0x4] sm:$0xf]
        %v1337 = vld [vmem:[#allocation8 + $0x8] sm:$0xf]
        %v1338 = vld [vmem:[#allocation8 + $0xc] sm:$0xf]
        %v1339 = vld [vmem:[#allocation8 + $0x10] sm:$0xf]
        %v1340 = vld [vmem:[#allocation8 + $0x14] sm:$0xf]
        %v1341 = vld [vmem:[#allocation8 + $0x18] sm:$0xf]
        %v1342 = vld [vmem:[#allocation8 + $0x1c] sm:$0xf]
        %v1343 = vld [vmem:[#allocation8 + $0x20] sm:$0xf]
        %v1344 = vld [vmem:[#allocation8 + $0x24] sm:$0xf]
        %v1345 = vld [vmem:[#allocation8 + $0x28] sm:$0xf]
        %v1346 = vld [vmem:[#allocation8 + $0x2c] sm:$0xf]
        %v1347 = vld [vmem:[#allocation8 + $0x30] sm:$0xf]
        %v1348 = vld [vmem:[#allocation8 + $0x34] sm:$0xf]
        %v1349 = vld [vmem:[#allocation8 + $0x38] sm:$0xf]
        %v1350 = vld [vmem:[#allocation8 + $0x3c] sm:$0xf]
        %v1351 = vld [vmem:[%s6] sm:$0x1]
        %v1353 = vlaneseq
        %v1354 = vshrl.u32 %v1353, 7
        %v1355 = vsub.s32 0, %v1354
        %v1356 = vrot.slane %v1351, %v1355
        %v1374 = vunpack.c.l.b16 %v1335
        %v1375 = vunpack.c.l.b16 %v1336
        %v1376 = vunpack.c.l.b16 %v1337
        %v1377 = vunpack.c.l.b16 %v1338
        %v1378 = vunpack.c.l.b16 %v1339
        %v1379 = vunpack.c.l.b16 %v1340
        %v1380 = vunpack.c.l.b16 %v1341
        %v1381 = vunpack.c.l.b16 %v1342
        %v1382 = vunpack.c.l.b16 %v1343
        %v1383 = vunpack.c.l.b16 %v1344
        %v1384 = vunpack.c.l.b16 %v1345
        %v1385 = vunpack.c.l.b16 %v1346
        %v1386 = vunpack.c.l.b16 %v1347
        %v1387 = vunpack.c.l.b16 %v1348
        %v1388 = vunpack.c.l.b16 %v1349
        %v1389 = vunpack.c.l.b16 %v1350
        %v1390 = vpack.c.b16 %v1375, %v1374
        %v1391 = vpack.c.b16 %v1377, %v1376
        %v1392 = vpack.c.b16 %v1379, %v1378
        %v1393 = vpack.c.b16 %v1381, %v1380
        %v1394 = vpack.c.b16 %v1383, %v1382
        %v1395 = vpack.c.b16 %v1385, %v1384
        %v1396 = vpack.c.b16 %v1387, %v1386
        %v1397 = vpack.c.b16 %v1389, %v1388
        %1406 = vmatprep.subr.bf16.mxu0 0
        %1407 = vmatpush1.bf16.msra.mxu0 %v1397
        %1408 = vmatprep.subr.bf16.mxu0 0
        %1409 = vmatpush1.bf16.msra.mxu0 %v1396
        %1410 = vmatprep.subr.bf16.mxu0 0
        %1411 = vmatpush1.bf16.msra.mxu0 %v1395
        %1412 = vmatprep.subr.bf16.mxu0 0
        %1413 = vmatpush1.bf16.msra.mxu0 %v1394
        %1414 = vmatprep.subr.bf16.mxu0 0
        %1415 = vmatpush1.bf16.msra.mxu0 %v1393
        %1416 = vmatprep.subr.bf16.mxu0 0
        %1417 = vmatpush1.bf16.msra.mxu0 %v1392
        %1418 = vmatprep.subr.bf16.mxu0 0
        %1419 = vmatpush1.bf16.msra.mxu0 %v1391
        %1420 = vmatprep.subr.bf16.mxu0 0
        %1421 = vmatpush1.bf16.msra.mxu0 %v1390
        %1422 = vmatprep.subr.bf16.mxu0 0
        %1423 = vmatpush2.bf16.msra.mxu0 0
        %1424 = vmatprep.subr.bf16.mxu0 0
        %1425 = vmatpush2.bf16.msra.mxu0 0
        %1426 = vmatprep.subr.bf16.mxu0 0
        %1427 = vmatpush2.bf16.msra.mxu0 0
        %1428 = vmatprep.subr.bf16.mxu0 0
        %1429 = vmatpush2.bf16.msra.mxu0 0
        %1430 = vmatprep.subr.bf16.mxu0 0
        %1431 = vmatpush2.bf16.msra.mxu0 0
        %1432 = vmatprep.subr.bf16.mxu0 0
        %1433 = vmatpush2.bf16.msra.mxu0 0
        %1434 = vmatprep.subr.bf16.mxu0 0
        %1435 = vmatpush2.bf16.msra.mxu0 0
        %1436 = vmatprep.subr.bf16.mxu0 0
        %1437 = vmatpush2.bf16.msra.mxu0 0
        %1438 = vmatprep.mubr.bf16.mxu0 0
        %1439 = vmatmul.mubr.bf16.gmra.mxu0 %v1327
        %v1440 = vpop.f32.mrf.mxu0
        %v1441 = vadd.f32 %v1356, %v1440
        %v1442 = vpop.f32.mrf.mxu0
        %v1443 = vpop.f32.mrf.mxu0
        %v1444 = vadd.f32 %v1356, %v1443
        %v1445 = vpop.f32.mrf.mxu0
        %1446 = vmatprep.mubr.bf16.mxu0 0
        %1447 = vmatmul.mubr.bf16.gmra.mxu0 %v1328
        %v1448 = vpop.f32.mrf.mxu0
        %v1449 = vadd.f32 %v1356, %v1448
        %v1450 = vpop.f32.mrf.mxu0
        %v1451 = vpop.f32.mrf.mxu0
        %v1452 = vadd.f32 %v1356, %v1451
        %v1453 = vpop.f32.mrf.mxu0
        %1454 = vmatprep.mubr.bf16.mxu0 0
        %1455 = vmatmul.mubr.bf16.gmra.mxu0 %v1329
        %v1456 = vpop.f32.mrf.mxu0
        %v1457 = vadd.f32 %v1356, %v1456
        %v1458 = vpop.f32.mrf.mxu0
        %v1459 = vpop.f32.mrf.mxu0
        %v1460 = vadd.f32 %v1356, %v1459
        %v1461 = vpop.f32.mrf.mxu0
        %1462 = vmatprep.mubr.bf16.mxu0 0
        %1463 = vmatmul.mubr.bf16.gmra.mxu0 %v1330
        %v1464 = vpop.f32.mrf.mxu0
        %v1465 = vadd.f32 %v1356, %v1464
        %v1466 = vpop.f32.mrf.mxu0
        %v1467 = vpop.f32.mrf.mxu0
        %v1468 = vadd.f32 %v1356, %v1467
        %v1469 = vpop.f32.mrf.mxu0
        %1470 = vmatprep.mubr.bf16.mxu0 0
        %1471 = vmatmul.mubr.bf16.gmra.mxu0 %v1331
        %v1472 = vpop.f32.mrf.mxu0
        %v1473 = vadd.f32 %v1356, %v1472
        %v1474 = vpop.f32.mrf.mxu0
        %v1475 = vpop.f32.mrf.mxu0
        %v1476 = vadd.f32 %v1356, %v1475
        %v1477 = vpop.f32.mrf.mxu0
        %1478 = vmatprep.mubr.bf16.mxu0 0
        %1479 = vmatmul.mubr.bf16.gmra.mxu0 %v1332
        %v1480 = vpop.f32.mrf.mxu0
        %v1481 = vadd.f32 %v1356, %v1480
        %v1482 = vpop.f32.mrf.mxu0
        %v1483 = vpop.f32.mrf.mxu0
        %v1484 = vadd.f32 %v1356, %v1483
        %v1485 = vpop.f32.mrf.mxu0
        %1486 = vmatprep.mubr.bf16.mxu0 0
        %1487 = vmatmul.mubr.bf16.gmra.mxu0 %v1333
        %v1488 = vpop.f32.mrf.mxu0
        %v1489 = vadd.f32 %v1356, %v1488
        %v1490 = vpop.f32.mrf.mxu0
        %v1491 = vpop.f32.mrf.mxu0
        %v1492 = vadd.f32 %v1356, %v1491
        %v1493 = vpop.f32.mrf.mxu0
        %1494 = vmatprep.mubr.bf16.mxu0 0
        %1495 = vmatmul.mubr.bf16.gmra.mxu0 %v1334
        %v1496 = vpop.f32.mrf.mxu0
        %v1497 = vadd.f32 %v1356, %v1496
        %v1498 = vpop.f32.mrf.mxu0
        %v1499 = vpop.f32.mrf.mxu0
        %v1500 = vadd.f32 %v1356, %v1499
        %v1501 = vpop.f32.mrf.mxu0
        %1502 = vdwg.mxu0
        %1503 = vmax.xlane.f32.xlu0 %v1441
        %v1504 = vpop.xlane.xlu0 %1503
        %1505 = vmax.xlane.f32.xlu0 %v1444
        %v1506 = vpop.xlane.xlu0 %1505
        %1507 = vmax.xlane.f32.xlu0 %v1449
        %v1508 = vpop.xlane.xlu0 %1507
        %1509 = vmax.xlane.f32.xlu0 %v1452
        %v1510 = vpop.xlane.xlu0 %1509
        %1511 = vmax.xlane.f32.xlu0 %v1457
        %v1512 = vpop.xlane.xlu0 %1511
        %1513 = vmax.xlane.f32.xlu0 %v1460
        %v1514 = vpop.xlane.xlu0 %1513
        %1515 = vmax.xlane.f32.xlu0 %v1465
        %v1516 = vpop.xlane.xlu0 %1515
        %1517 = vmax.xlane.f32.xlu0 %v1468
        %v1518 = vpop.xlane.xlu0 %1517
        %1519 = vmax.xlane.f32.xlu0 %v1473
        %v1520 = vpop.xlane.xlu0 %1519
        %1521 = vmax.xlane.f32.xlu0 %v1476
        %v1522 = vpop.xlane.xlu0 %1521
        %1523 = vmax.xlane.f32.xlu0 %v1481
        %v1524 = vpop.xlane.xlu0 %1523
        %1525 = vmax.xlane.f32.xlu0 %v1484
        %v1526 = vpop.xlane.xlu0 %1525
        %1527 = vmax.xlane.f32.xlu0 %v1489
        %v1528 = vpop.xlane.xlu0 %1527
        %1529 = vmax.xlane.f32.xlu0 %v1492
        %v1530 = vpop.xlane.xlu0 %1529
        %1531 = vmax.xlane.f32.xlu0 %v1497
        %v1532 = vpop.xlane.xlu0 %1531
        %1533 = vmax.xlane.f32.xlu0 %v1500
        %v1534 = vpop.xlane.xlu0 %1533
        %v1535 = vsub.f32 %v1441, %v1504
        %v1536 = vsub.f32 %v1444, %v1506
        %v1537 = vsub.f32 %v1449, %v1508
        %v1538 = vsub.f32 %v1452, %v1510
        %v1539 = vsub.f32 %v1457, %v1512
        %v1540 = vsub.f32 %v1460, %v1514
        %v1541 = vsub.f32 %v1465, %v1516
        %v1542 = vsub.f32 %v1468, %v1518
        %v1543 = vsub.f32 %v1473, %v1520
        %v1544 = vsub.f32 %v1476, %v1522
        %v1545 = vsub.f32 %v1481, %v1524
        %v1546 = vsub.f32 %v1484, %v1526
        %v1547 = vsub.f32 %v1489, %v1528
        %v1548 = vsub.f32 %v1492, %v1530
        %v1549 = vsub.f32 %v1497, %v1532
        %v1550 = vsub.f32 %v1500, %v1534
        %v1551 = vmul.f32 %v1535, 1.442695
        %v1552 = vpow.pop %v1551
        %v1553 = vmul.f32 %v1536, 1.442695
        %v1554 = vpow.pop %v1553
        %v1555 = vmul.f32 %v1537, 1.442695
        %v1556 = vpow.pop %v1555
        %v1557 = vmul.f32 %v1538, 1.442695
        %v1558 = vpow.pop %v1557
        %v1559 = vmul.f32 %v1539, 1.442695
        %v1560 = vpow.pop %v1559
        %v1561 = vmul.f32 %v1540, 1.442695
        %v1562 = vpow.pop %v1561
        %v1563 = vmul.f32 %v1541, 1.442695
        %v1564 = vpow.pop %v1563
        %v1565 = vmul.f32 %v1542, 1.442695
        %v1566 = vpow.pop %v1565
        %v1567 = vmul.f32 %v1543, 1.442695
        %v1568 = vpow.pop %v1567
        %v1569 = vmul.f32 %v1544, 1.442695
        %v1570 = vpow.pop %v1569
        %v1571 = vmul.f32 %v1545, 1.442695
        %v1572 = vpow.pop %v1571
        %v1573 = vmul.f32 %v1546, 1.442695
        %v1574 = vpow.pop %v1573
        %v1575 = vmul.f32 %v1547, 1.442695
        %v1576 = vpow.pop %v1575
        %v1577 = vmul.f32 %v1548, 1.442695
        %v1578 = vpow.pop %v1577
        %v1579 = vmul.f32 %v1549, 1.442695
        %v1580 = vpow.pop %v1579
        %v1581 = vmul.f32 %v1550, 1.442695
        %v1582 = vpow.pop %v1581
        %1583 = vadd.xlane.f32.xlu0 %v1552
        %v1584 = vpop.xlane.xlu0 %1583
        %1585 = vadd.xlane.f32.xlu0 %v1554
        %v1586 = vpop.xlane.xlu0 %1585
        %1587 = vadd.xlane.f32.xlu0 %v1556
        %v1588 = vpop.xlane.xlu0 %1587
        %1589 = vadd.xlane.f32.xlu0 %v1558
        %v1590 = vpop.xlane.xlu0 %1589
        %1591 = vadd.xlane.f32.xlu0 %v1560
        %v1592 = vpop.xlane.xlu0 %1591
        %1593 = vadd.xlane.f32.xlu0 %v1562
        %v1594 = vpop.xlane.xlu0 %1593
        %1595 = vadd.xlane.f32.xlu0 %v1564
        %v1596 = vpop.xlane.xlu0 %1595
        %1597 = vadd.xlane.f32.xlu0 %v1566
        %v1598 = vpop.xlane.xlu0 %1597
        %1599 = vadd.xlane.f32.xlu0 %v1568
        %v1600 = vpop.xlane.xlu0 %1599
        %1601 = vadd.xlane.f32.xlu0 %v1570
        %v1602 = vpop.xlane.xlu0 %1601
        %1603 = vadd.xlane.f32.xlu0 %v1572
        %v1604 = vpop.xlane.xlu0 %1603
        %1605 = vadd.xlane.f32.xlu0 %v1574
        %v1606 = vpop.xlane.xlu0 %1605
        %1607 = vadd.xlane.f32.xlu0 %v1576
        %v1608 = vpop.xlane.xlu0 %1607
        %1609 = vadd.xlane.f32.xlu0 %v1578
        %v1610 = vpop.xlane.xlu0 %1609
        %1611 = vadd.xlane.f32.xlu0 %v1580
        %v1612 = vpop.xlane.xlu0 %1611
        %1613 = vadd.xlane.f32.xlu0 %v1582
        %v1614 = vpop.xlane.xlu0 %1613
        %v1615 = vrcp.pop %v1584
        %v1616 = vrcp.pop %v1586
        %v1617 = vrcp.pop %v1588
        %v1618 = vrcp.pop %v1590
        %v1619 = vrcp.pop %v1592
        %v1620 = vrcp.pop %v1594
        %v1621 = vrcp.pop %v1596
        %v1622 = vrcp.pop %v1598
        %v1623 = vrcp.pop %v1600
        %v1624 = vrcp.pop %v1602
        %v1625 = vrcp.pop %v1604
        %v1626 = vrcp.pop %v1606
        %v1627 = vrcp.pop %v1608
        %v1628 = vrcp.pop %v1610
        %v1629 = vrcp.pop %v1612
        %v1630 = vrcp.pop %v1614
        %v1631 = vmul.f32 %v1552, %v1615
        %v1632 = vmul.f32 %v1554, %v1616
        %v1633 = vmul.f32 %v1556, %v1617
        %v1634 = vmul.f32 %v1558, %v1618
        %v1635 = vmul.f32 %v1560, %v1619
        %v1636 = vmul.f32 %v1562, %v1620
        %v1637 = vmul.f32 %v1564, %v1621
        %v1638 = vmul.f32 %v1566, %v1622
        %v1639 = vmul.f32 %v1568, %v1623
        %v1640 = vmul.f32 %v1570, %v1624
        %v1641 = vmul.f32 %v1572, %v1625
        %v1642 = vmul.f32 %v1574, %v1626
        %v1643 = vmul.f32 %v1576, %v1627
        %v1644 = vmul.f32 %v1578, %v1628
        %v1645 = vmul.f32 %v1580, %v1629
        %v1646 = vmul.f32 %v1582, %v1630
        %v1647 = vpack.c.bf16 %v1632, %v1631
        %v1648 = vpack.c.bf16 %v1634, %v1633
        %v1649 = vpack.c.bf16 %v1636, %v1635
        %v1650 = vpack.c.bf16 %v1638, %v1637
        %v1651 = vpack.c.bf16 %v1640, %v1639
        %v1652 = vpack.c.bf16 %v1642, %v1641
        %v1653 = vpack.c.bf16 %v1644, %v1643
        %v1654 = vpack.c.bf16 %v1646, %v1645
        %v1663 = vunpack.c.l.b16 %v1647
        %v1664 = vunpack.c.h.b16 %v1647
        %v1665 = vunpack.c.l.b16 %v1648
        %v1666 = vunpack.c.h.b16 %v1648
        %v1667 = vunpack.c.l.b16 %v1649
        %v1668 = vunpack.c.h.b16 %v1649
        %v1669 = vunpack.c.l.b16 %v1650
        %v1670 = vunpack.c.h.b16 %v1650
        %v1671 = vunpack.c.l.b16 %v1651
        %v1672 = vunpack.c.h.b16 %v1651
        %v1673 = vunpack.c.l.b16 %v1652
        %v1674 = vunpack.c.h.b16 %v1652
        %v1675 = vunpack.c.l.b16 %v1653
        %v1676 = vunpack.c.h.b16 %v1653
        %v1677 = vunpack.c.l.b16 %v1654
        %v1678 = vunpack.c.h.b16 %v1654
        %v1679 = vpack.c.b16 %v1663, %v1663
        %v1680 = vpack.c.b16 %v1664, %v1664
        %v1681 = vpack.c.b16 %v1665, %v1665
        %v1682 = vpack.c.b16 %v1666, %v1666
        %v1683 = vpack.c.b16 %v1667, %v1667
        %v1684 = vpack.c.b16 %v1668, %v1668
        %v1685 = vpack.c.b16 %v1669, %v1669
        %v1686 = vpack.c.b16 %v1670, %v1670
        %v1687 = vpack.c.b16 %v1671, %v1671
        %v1688 = vpack.c.b16 %v1672, %v1672
        %v1689 = vpack.c.b16 %v1673, %v1673
        %v1690 = vpack.c.b16 %v1674, %v1674
        %v1691 = vpack.c.b16 %v1675, %v1675
        %v1692 = vpack.c.b16 %v1676, %v1676
        %v1693 = vpack.c.b16 %v1677, %v1677
        %v1694 = vpack.c.b16 %v1678, %v1678
        %1711 = vst [vmem:[%s341] sm:$0xf] %v1679
        %1712 = vst [vmem:[%s341 + $0x4] sm:$0xf] %v1680
        %1713 = vst [vmem:[%s341 + $0x8] sm:$0xf] %v1681
        %1714 = vst [vmem:[%s341 + $0xc] sm:$0xf] %v1682
        %1715 = vst [vmem:[%s341 + $0x10] sm:$0xf] %v1683
        %1716 = vst [vmem:[%s341 + $0x14] sm:$0xf] %v1684
        %1717 = vst [vmem:[%s341 + $0x18] sm:$0xf] %v1685
        %1718 = vst [vmem:[%s341 + $0x1c] sm:$0xf] %v1686
        %1719 = vst [vmem:[%s341 + $0x20] sm:$0xf] %v1687
        %1720 = vst [vmem:[%s341 + $0x24] sm:$0xf] %v1688
        %1721 = vst [vmem:[%s341 + $0x28] sm:$0xf] %v1689
        %1722 = vst [vmem:[%s341 + $0x2c] sm:$0xf] %v1690
        %1723 = vst [vmem:[%s341 + $0x30] sm:$0xf] %v1691
        %1724 = vst [vmem:[%s341 + $0x34] sm:$0xf] %v1692
        %1725 = vst [vmem:[%s341 + $0x38] sm:$0xf] %v1693
        %1726 = vst [vmem:[%s341 + $0x3c] sm:$0xf] %v1694
        %s1727 = sand.u32 %s186, 1
        %s1728 = scalar_lea.sflag [#allocation4], %s1727
        %s1729 = sand.u32 %s186, 1
        %s1730 = smul.addr %s1729, 64
        %s1731 = scalar_lea.vmem [#allocation10], %s1730
        // Predicated region
        $region65: #{tpu_custom_call.1} parent=47 // pred_check
          %p1732 = pneg %p196
        $region66: #{tpu_custom_call.1} parent=47 // pred_check_branch
          %1734 = sbr.rel (%p1732) target = $region68
        $region67: #{tpu_custom_call.1} parent=47 // pred_region
          %s1735 = smul.u32 16, %s26
          %s1737 = ssub.s32 1024, 1024
          %1738 = vsyncadd %s1728, %s1737
          %s1739 = smul.addr %s1735, 64
          %s1740 = scalar_lea.hbm %s7, %s1739
          %s1741 = sshll.u32 %s1731, 4
          %s1742 = int_to_ptr.vmem [resolvable:$true] %s1741
          %1747 = dma.vmem_to_hbm [thread:$0]  %s1742, 1024, %s1740, %s1728, 64, 64, 4
        $region68: #{tpu_custom_call.1} parent=47 // pred_fallthru
          _
      $region48: #{tpu_custom_call.1} parent=5 // pred_fallthru
        _
      %p1748 = scmp.le.s32.totalorder 2, %s21
      // Predicated region
      $region69: #{tpu_custom_call.1} parent=5 // pred_check
        %p1749 = pneg %p1748
      $region70: #{tpu_custom_call.1} parent=5 // pred_check_branch
        %1751 = sbr.rel (%p1749) target = $region72
      $region71: #{tpu_custom_call.1} parent=5 // pred_region
        %s1752 = ssub.s32 %s21, 2
        // Predicated region
        $region73: #{tpu_custom_call.1} parent=71 // pred_check
          %p1753 = pneg %p202
        $region74: #{tpu_custom_call.1} parent=71 // pred_check_branch
          %1755 = sbr.rel (%p1753) target = $region76
        $region75: #{tpu_custom_call.1} parent=71 // pred_region
          %s1756 = sand.u32 %s187, 1
          %s1757 = scalar_lea.sflag [#allocation4], %s1756
          %s1758 = sand.u32 %s187, 1
          %s1759 = smul.addr %s1758, 64
          %s1760 = scalar_lea.vmem [#allocation10], %s1759
          %1761 = dma.done %s1757, 1024
        $region76: #{tpu_custom_call.1} parent=71 // pred_fallthru
          _
      $region72: #{tpu_custom_call.1} parent=5 // pred_fallthru
        _
    $region6: #{tpu_custom_call.1} parent=1 // loop_footer
      %s25 = sadd.s32 1, %s21
    $region7: #{tpu_custom_call.1} parent=1 // loop_footer_branch
      %20 = sbr.rel target = $region3
    $region8: #{tpu_custom_call.1} parent=1 // loop_exit
      _
    %1762 = vsyncpa [#allocation3], 1
    %s1763 = scalar_lea.sflag [#allocation3], 1
    %1764 = vsyncpa %s1763, 1
    %1765 = vsyncpa [#allocation6], 1
    %1766 = vsyncpa [#allocation9], 1
    %1767 = vsyncpa [#allocation4], 1
    %s1768 = scalar_lea.sflag [#allocation4], 1
    %1769 = vsyncpa %s1768, 1

</llo_original>
